<compile_context>
chip_gen: v7x
topology: tpu7x:2x2x1
jax: 0.10.0
libtpu: 0.0.40
codegen_flags: <defaults>
</compile_context>

<pallas_src>
import functools

import jax
import jax.numpy as jnp
from jax.experimental import pallas as pl
from jax.experimental.pallas import tpu as pltpu


# ----------------------------- Pallas kernel ---------------------------------

def _temple_kernel(B, T, n_heads,
                   x_ref, rw_ref,
                   wh_ref, bh_ref,
                   g_ref, beta_ref,
                   wqkv_ref, bqkv_ref,
                   wo_ref, bo_ref,
                   wfc_ref, bfc_ref,
                   out_ref):
    f32 = jnp.float32
    bf16 = jnp.bfloat16

    x = x_ref[...]                      # [B*T, D] float32
    BT, D = x.shape
    H = n_heads
    Dh = D // H

    # --- TempleGate gating: x = x * resonance_weights ---
    # TODO(synk): TempleGate class definition not provided; resonance_weights is a
    # deterministic per-feature vector built from the breath_vector, gate output = x.
    xg = x * rw_ref[...]

    # --- TempleHeart (symbolic transformation) ---
    # TODO(synk): TempleHeart class definition not provided; approximated as a
    # learned linear d_model->d_model followed by tanh.
    h = jnp.tanh(
        jnp.dot(xg.astype(bf16), wh_ref[...], preferred_element_type=f32)
        + bh_ref[...])

    gamma = g_ref[...]                  # [1, D]
    beta = beta_ref[...]                # [1, D]

    def layer_norm(z):                  # f32 in / f32 out, shared ln params
        mu = jnp.mean(z, axis=-1, keepdims=True)
        var = jnp.mean((z - mu) ** 2, axis=-1, keepdims=True)
        return (z - mu) * jax.lax.rsqrt(var + 1e-5) * gamma + beta

    x_ln = layer_norm(h)                # [BT, D]

    # --- MultiheadAttention (batch_first, no mask, dropout=0) ---
    # Fused QKV projection: one [BT, D] x [D, 3D] matmul (96 output lanes).
    qkv = (jnp.dot(x_ln.astype(bf16), wqkv_ref[...], preferred_element_type=f32)
           + bqkv_ref[...])             # [BT, 3D]; Q columns pre-scaled by 1/sqrt(Dh)
    qkv_b = qkv.reshape(B, T, 3 * D).astype(bf16)   # leading-dim split only (free)

    attn = jnp.zeros((BT, D), f32)
    for hd in range(H):                 # trace-time unrolled; H is small
        lo = hd * Dh
        qh = qkv_b[:, :, lo:lo + Dh]                        # [B, T, Dh]
        kh = qkv_b[:, :, D + lo:D + lo + Dh]
        vh = qkv_b[:, :, 2 * D + lo:2 * D + lo + Dh]
        s = jnp.einsum('btd,bsd->bts', qh, kh,
                       preferred_element_type=f32)          # [B, T, T]
        s = s - jnp.max(s, axis=-1, keepdims=True)
        e = jnp.exp(s)
        p = e * pl.reciprocal(jnp.sum(e, axis=-1, keepdims=True), approx=True)
        ctx = jnp.einsum('bts,bsd->btd', p.astype(bf16), vh,
                         preferred_element_type=f32)        # [B, T, Dh]
        # Fold this head's slice of the output projection (no lane concatenate).
        attn = attn + jnp.dot(ctx.reshape(BT, Dh).astype(bf16), wo_ref[hd],
                              preferred_element_type=f32)   # [BT, D]
    attn = attn + bo_ref[...]

    # --- residual + second LayerNorm (same nn.LayerNorm instance in the module) ---
    x2 = layer_norm(h + attn)

    # --- fc_out: d_model -> vocab (padded to a lane-dense 128-wide slab) ---
    logits = (jnp.dot(x2.astype(bf16), wfc_ref[...], preferred_element_type=f32)
              + bfc_ref[...])           # [BT, Vp]

    # --- TempleVoice ---
    # TODO(synk): TempleVoice class definition not provided; treated as identity on logits.
    out_ref[...] = logits


# ------------------------------ JAX wrapper -----------------------------------

def _pack_kernel_params(params, n_heads):
    """Host-side (free) packing: fuse QKV, fold q-scale, pad vocab, cast weights to bf16."""
    bf16 = jnp.bfloat16
    D = params["wh"].shape[0]
    V = params["wfc"].shape[1]
    Vp = -(-V // 128) * 128             # pad vocab to a multiple of 128 lanes
    Dh = D // n_heads
    scale = 1.0 / (Dh ** 0.5)

    wqkv = jnp.concatenate(
        [params["wq"] * scale, params["wk"], params["wv"]], axis=1).astype(bf16)
    bqkv = jnp.concatenate(
        [params["bq"] * scale, params["bk"], params["bv"]], axis=1)
    wo_h = params["wo"].reshape(n_heads, Dh, D).astype(bf16)
    wfc = jnp.pad(params["wfc"], ((0, 0), (0, Vp - V))).astype(bf16)
    bfc = jnp.pad(params["bfc"], ((0, 0), (0, Vp - V)))

    return dict(
        rw=params["rw"],
        wh=params["wh"].astype(bf16), bh=params["bh"],
        ln_g=params["ln_g"], ln_b=params["ln_b"],
        wqkv=wqkv, bqkv=bqkv,
        wo_h=wo_h, bo=params["bo"],
        wfc=wfc, bfc=bfc,
        V=V, Vp=Vp,
    )


def mini_temple_transformer(tokens, params, *, n_heads):
    """tokens: [B, T] int32.  Returns logits [B, T, vocab] (mode='logits')."""
    emb = params["embed"]                       # [V, D]
    # TODO(synk): embedding gather kept as plain-JAX glue; could be moved in-kernel via
    # PrefetchScalarGridSpec + pl.Element if B/T grow.
    x = emb[tokens]                             # [B, T, D] float32

    B, T, D = x.shape
    assert D % n_heads == 0
    kp = _pack_kernel_params(params, n_heads)
    V, Vp = kp["V"], kp["Vp"]

    x2 = x.reshape(B * T, D)                    # flat activation slab

    def vmem():
        return pl.BlockSpec(memory_space=pltpu.MemorySpace.VMEM)

    kernel = functools.partial(_temple_kernel, B, T, n_heads)
    out = pl.pallas_call(
        kernel,
        out_shape=jax.ShapeDtypeStruct((B * T, Vp), jnp.float32),
        in_specs=[vmem() for _ in range(12)],
        out_specs=vmem(),
    )(
        x2, kp["rw"],
        kp["wh"], kp["bh"],
        kp["ln_g"], kp["ln_b"],
        kp["wqkv"], kp["bqkv"],
        kp["wo_h"], kp["bo"],
        kp["wfc"], kp["bfc"],
    )
    # strip vocab padding, restore [B, T, V]
    return out.reshape(B, T, Vp)[:, :, :V]


def make_params(key, vocab_size, d_model):
    ks = jax.random.split(key, 10)
    f32 = jnp.float32
    s = 0.02

    # TempleGate constants from the module __init__ (breath_vector drives gating).
    breath_vector = jnp.array([26.0, 8.0, 14.0, 16.0, 7.0], dtype=f32)
    reps = (d_model + breath_vector.shape[0] - 1) // breath_vector.shape[0]
    bv_tiled = jnp.tile(breath_vector, reps)[:d_model]
    rw = (1.0 + 0.01 * bv_tiled).reshape(1, d_model)   # deterministic resonance weights

    params = {
        "embed": s * jax.random.normal(ks[0], (vocab_size, d_model), f32),
        "rw": rw,
        "wh": s * jax.random.normal(ks[1], (d_model, d_model), f32),
        "bh": jnp.zeros((1, d_model), f32),
        "ln_g": jnp.ones((1, d_model), f32),
        "ln_b": jnp.zeros((1, d_model), f32),
        "wq": s * jax.random.normal(ks[2], (d_model, d_model), f32),
        "bq": jnp.zeros((1, d_model), f32),
        "wk": s * jax.random.normal(ks[3], (d_model, d_model), f32),
        "bk": jnp.zeros((1, d_model), f32),
        "wv": s * jax.random.normal(ks[4], (d_model, d_model), f32),
        "bv": jnp.zeros((1, d_model), f32),
        "wo": s * jax.random.normal(ks[5], (d_model, d_model), f32),
        "bo": jnp.zeros((1, d_model), f32),
        "wfc": s * jax.random.normal(ks[6], (d_model, vocab_size), f32),
        "bfc": jnp.zeros((1, vocab_size), f32),
    }
    return params


if __name__ == "__main__":
    vocab_size, d_model, n_heads = 64, 32, 4
    B, T = 2, 8

    key = jax.random.PRNGKey(0)
    pkey, tkey = jax.random.split(key)
    params = make_params(pkey, vocab_size, d_model)
    tokens = jax.random.randint(tkey, (B, T), 0, vocab_size, dtype=jnp.int32)

    logits = mini_temple_transformer(tokens, params, n_heads=n_heads)
    jax.block_until_ready(logits)
    assert logits.shape == (B, T, vocab_size)
    print("KERNEL_OK")
</pallas_src>

<mosaic_0001>
module attributes {stable_mosaic.version = 11 : i64} {
  func.func @_temple_kernel(%arg0: memref<16x32xf32, #tpu.memory_space<vmem>>, %arg1: memref<1x32xf32, #tpu.memory_space<vmem>>, %arg2: memref<32x32xbf16, #tpu.memory_space<vmem>>, %arg3: memref<1x32xf32, #tpu.memory_space<vmem>>, %arg4: memref<1x32xf32, #tpu.memory_space<vmem>>, %arg5: memref<1x32xf32, #tpu.memory_space<vmem>>, %arg6: memref<32x96xbf16, #tpu.memory_space<vmem>>, %arg7: memref<1x96xf32, #tpu.memory_space<vmem>>, %arg8: memref<4x8x32xbf16, #tpu.memory_space<vmem>>, %arg9: memref<1x32xf32, #tpu.memory_space<vmem>>, %arg10: memref<32x128xbf16, #tpu.memory_space<vmem>>, %arg11: memref<1x128xf32, #tpu.memory_space<vmem>>, %arg12: memref<16x128xf32, #tpu.memory_space<vmem>>) attributes {dimension_semantics = [], scalar_prefetch = 0 : i64, scratch_operands = 0 : i64, tpu.core_type = #tpu.core_type<tc>} {
    %c0 = arith.constant 0 : index
    %c0_0 = arith.constant 0 : index
    %0 = vector.load %arg0[%c0, %c0_0] : memref<16x32xf32, #tpu.memory_space<vmem>>, vector<16x32xf32>
    %c0_1 = arith.constant 0 : index
    %c0_2 = arith.constant 0 : index
    %1 = vector.load %arg1[%c0_1, %c0_2] : memref<1x32xf32, #tpu.memory_space<vmem>>, vector<1x32xf32>
    %2 = vector.broadcast %1 : vector<1x32xf32> to vector<16x32xf32>
    %3 = arith.mulf %0, %2 : vector<16x32xf32>
    %4 = arith.truncf %3 : vector<16x32xf32> to vector<16x32xbf16>
    %c0_3 = arith.constant 0 : index
    %c0_4 = arith.constant 0 : index
    %5 = vector.load %arg2[%c0_3, %c0_4] : memref<32x32xbf16, #tpu.memory_space<vmem>>, vector<32x32xbf16>
    %cst = arith.constant dense<0.000000e+00> : vector<16x32xf32>
    %6 = tpu.matmul %4, %5, %cst {dimension_numbers = #tpu.dot_dimension_numbers<[1], [0], [0], [1], [0, 0, 1, 1], [], []>} : vector<16x32xbf16>, vector<32x32xbf16>, vector<16x32xf32> -> vector<16x32xf32>
    %c0_5 = arith.constant 0 : index
    %c0_6 = arith.constant 0 : index
    %7 = vector.load %arg3[%c0_5, %c0_6] : memref<1x32xf32, #tpu.memory_space<vmem>>, vector<1x32xf32>
    %8 = vector.broadcast %7 : vector<1x32xf32> to vector<16x32xf32>
    %9 = arith.addf %6, %8 : vector<16x32xf32>
    %10 = math.tanh %9 : vector<16x32xf32>
    %c0_7 = arith.constant 0 : index
    %c0_8 = arith.constant 0 : index
    %11 = vector.load %arg4[%c0_7, %c0_8] : memref<1x32xf32, #tpu.memory_space<vmem>>, vector<1x32xf32>
    %c0_9 = arith.constant 0 : index
    %c0_10 = arith.constant 0 : index
    %12 = vector.load %arg5[%c0_9, %c0_10] : memref<1x32xf32, #tpu.memory_space<vmem>>, vector<1x32xf32>
    %cst_11 = arith.constant dense<0.000000e+00> : vector<16xf32>
    %13 = vector.multi_reduction <add>, %10, %cst_11 [1] : vector<16x32xf32> to vector<16xf32>
    %14 = vector.shape_cast %13 : vector<16xf32> to vector<16x1xf32>
    %cst_12 = arith.constant 3.200000e+01 : f32
    %15 = vector.broadcast %cst_12 : f32 to vector<16x1xf32>
    %16 = arith.divf %14, %15 : vector<16x1xf32>
    %17 = vector.broadcast %16 : vector<16x1xf32> to vector<16x32xf32>
    %18 = arith.subf %10, %17 : vector<16x32xf32>
    %19 = arith.mulf %18, %18 : vector<16x32xf32>
    %cst_13 = arith.constant dense<0.000000e+00> : vector<16xf32>
    %20 = vector.multi_reduction <add>, %19, %cst_13 [1] : vector<16x32xf32> to vector<16xf32>
    %21 = vector.shape_cast %20 : vector<16xf32> to vector<16x1xf32>
    %cst_14 = arith.constant 3.200000e+01 : f32
    %22 = vector.broadcast %cst_14 : f32 to vector<16x1xf32>
    %23 = arith.divf %21, %22 : vector<16x1xf32>
    %24 = vector.broadcast %16 : vector<16x1xf32> to vector<16x32xf32>
    %25 = arith.subf %10, %24 : vector<16x32xf32>
    %cst_15 = arith.constant 9.99999974E-6 : f32
    %26 = vector.broadcast %cst_15 : f32 to vector<16x1xf32>
    %27 = arith.addf %23, %26 : vector<16x1xf32>
    %28 = math.rsqrt %27 : vector<16x1xf32>
    %29 = vector.broadcast %28 : vector<16x1xf32> to vector<16x32xf32>
    %30 = arith.mulf %25, %29 : vector<16x32xf32>
    %31 = vector.broadcast %11 : vector<1x32xf32> to vector<16x32xf32>
    %32 = arith.mulf %30, %31 : vector<16x32xf32>
    %33 = vector.broadcast %12 : vector<1x32xf32> to vector<16x32xf32>
    %34 = arith.addf %32, %33 : vector<16x32xf32>
    %35 = arith.truncf %34 : vector<16x32xf32> to vector<16x32xbf16>
    %c0_16 = arith.constant 0 : index
    %c0_17 = arith.constant 0 : index
    %36 = vector.load %arg6[%c0_16, %c0_17] : memref<32x96xbf16, #tpu.memory_space<vmem>>, vector<32x96xbf16>
    %cst_18 = arith.constant dense<0.000000e+00> : vector<16x96xf32>
    %37 = tpu.matmul %35, %36, %cst_18 {dimension_numbers = #tpu.dot_dimension_numbers<[1], [0], [0], [1], [0, 0, 1, 1], [], []>} : vector<16x32xbf16>, vector<32x96xbf16>, vector<16x96xf32> -> vector<16x96xf32>
    %c0_19 = arith.constant 0 : index
    %c0_20 = arith.constant 0 : index
    %38 = vector.load %arg7[%c0_19, %c0_20] : memref<1x96xf32, #tpu.memory_space<vmem>>, vector<1x96xf32>
    %39 = vector.broadcast %38 : vector<1x96xf32> to vector<16x96xf32>
    %40 = arith.addf %37, %39 : vector<16x96xf32>
    %41 = vector.shape_cast %40 : vector<16x96xf32> to vector<2x8x96xf32>
    %42 = arith.truncf %41 : vector<2x8x96xf32> to vector<2x8x96xbf16>
    %cst_21 = arith.constant 0.000000e+00 : f32
    %43 = vector.broadcast %cst_21 : f32 to vector<16x32xf32>
    %44 = vector.extract_strided_slice %42 {offsets = [0, 0, 0], sizes = [2, 8, 8], strides = [1, 1, 1]} : vector<2x8x96xbf16> to vector<2x8x8xbf16>
    %45 = vector.extract_strided_slice %42 {offsets = [0, 0, 32], sizes = [2, 8, 8], strides = [1, 1, 1]} : vector<2x8x96xbf16> to vector<2x8x8xbf16>
    %46 = vector.extract_strided_slice %42 {offsets = [0, 0, 64], sizes = [2, 8, 8], strides = [1, 1, 1]} : vector<2x8x96xbf16> to vector<2x8x8xbf16>
    "tpu.trace_start"() <{level = 10 : i32, message = "btd,bsd->bts"}> : () -> ()
    %cst_22 = arith.constant dense<0.000000e+00> : vector<2x8x8xf32>
    %47 = tpu.matmul %44, %45, %cst_22 {dimension_numbers = #tpu.dot_dimension_numbers<[2], [2], [1], [1], [0, 0, 0, 1, 1, 1], [0], [0]>} : vector<2x8x8xbf16>, vector<2x8x8xbf16>, vector<2x8x8xf32> -> vector<2x8x8xf32>
    "tpu.trace_stop"() : () -> ()
    %cst_23 = arith.constant dense<0xFF800000> : vector<2x8xf32>
    %48 = vector.multi_reduction <maximumf>, %47, %cst_23 [2] : vector<2x8x8xf32> to vector<2x8xf32>
    %49 = vector.shape_cast %48 : vector<2x8xf32> to vector<2x8x1xf32>
    %50 = vector.broadcast %49 : vector<2x8x1xf32> to vector<2x8x8xf32>
    %51 = arith.subf %47, %50 : vector<2x8x8xf32>
    %52 = math.exp %51 : vector<2x8x8xf32>
    %cst_24 = arith.constant dense<0.000000e+00> : vector<2x8xf32>
    %53 = vector.multi_reduction <add>, %52, %cst_24 [2] : vector<2x8x8xf32> to vector<2x8xf32>
    %54 = vector.shape_cast %53 : vector<2x8xf32> to vector<2x8x1xf32>
    %55 = tpu.reciprocal %54 {approx = true} : vector<2x8x1xf32> -> vector<2x8x1xf32>
    %56 = vector.broadcast %55 : vector<2x8x1xf32> to vector<2x8x8xf32>
    %57 = arith.mulf %52, %56 : vector<2x8x8xf32>
    %58 = arith.truncf %57 : vector<2x8x8xf32> to vector<2x8x8xbf16>
    "tpu.trace_start"() <{level = 10 : i32, message = "bts,bsd->btd"}> : () -> ()
    %cst_25 = arith.constant dense<0.000000e+00> : vector<2x8x8xf32>
    %59 = tpu.matmul %58, %46, %cst_25 {dimension_numbers = #tpu.dot_dimension_numbers<[2], [1], [1], [2], [0, 0, 0, 1, 1, 2], [0], [0]>} : vector<2x8x8xbf16>, vector<2x8x8xbf16>, vector<2x8x8xf32> -> vector<2x8x8xf32>
    "tpu.trace_stop"() : () -> ()
    %60 = vector.shape_cast %59 : vector<2x8x8xf32> to vector<16x8xf32>
    %61 = arith.truncf %60 : vector<16x8xf32> to vector<16x8xbf16>
    %c0_26 = arith.constant 0 : index
    %c0_27 = arith.constant 0 : index
    %c0_28 = arith.constant 0 : index
    %62 = vector.load %arg8[%c0_26, %c0_27, %c0_28] : memref<4x8x32xbf16, #tpu.memory_space<vmem>>, vector<1x8x32xbf16>
    %63 = vector.shape_cast %62 : vector<1x8x32xbf16> to vector<8x32xbf16>
    %cst_29 = arith.constant dense<0.000000e+00> : vector<16x32xf32>
    %64 = tpu.matmul %61, %63, %cst_29 {dimension_numbers = #tpu.dot_dimension_numbers<[1], [0], [0], [1], [0, 0, 1, 1], [], []>} : vector<16x8xbf16>, vector<8x32xbf16>, vector<16x32xf32> -> vector<16x32xf32>
    %65 = arith.addf %43, %64 : vector<16x32xf32>
    %66 = vector.extract_strided_slice %42 {offsets = [0, 0, 8], sizes = [2, 8, 8], strides = [1, 1, 1]} : vector<2x8x96xbf16> to vector<2x8x8xbf16>
    %67 = vector.extract_strided_slice %42 {offsets = [0, 0, 40], sizes = [2, 8, 8], strides = [1, 1, 1]} : vector<2x8x96xbf16> to vector<2x8x8xbf16>
    %68 = vector.extract_strided_slice %42 {offsets = [0, 0, 72], sizes = [2, 8, 8], strides = [1, 1, 1]} : vector<2x8x96xbf16> to vector<2x8x8xbf16>
    "tpu.trace_start"() <{level = 10 : i32, message = "btd,bsd->bts"}> : () -> ()
    %cst_30 = arith.constant dense<0.000000e+00> : vector<2x8x8xf32>
    %69 = tpu.matmul %66, %67, %cst_30 {dimension_numbers = #tpu.dot_dimension_numbers<[2], [2], [1], [1], [0, 0, 0, 1, 1, 1], [0], [0]>} : vector<2x8x8xbf16>, vector<2x8x8xbf16>, vector<2x8x8xf32> -> vector<2x8x8xf32>
    "tpu.trace_stop"() : () -> ()
    %cst_31 = arith.constant dense<0xFF800000> : vector<2x8xf32>
    %70 = vector.multi_reduction <maximumf>, %69, %cst_31 [2] : vector<2x8x8xf32> to vector<2x8xf32>
    %71 = vector.shape_cast %70 : vector<2x8xf32> to vector<2x8x1xf32>
    %72 = vector.broadcast %71 : vector<2x8x1xf32> to vector<2x8x8xf32>
    %73 = arith.subf %69, %72 : vector<2x8x8xf32>
    %74 = math.exp %73 : vector<2x8x8xf32>
    %cst_32 = arith.constant dense<0.000000e+00> : vector<2x8xf32>
    %75 = vector.multi_reduction <add>, %74, %cst_32 [2] : vector<2x8x8xf32> to vector<2x8xf32>
    %76 = vector.shape_cast %75 : vector<2x8xf32> to vector<2x8x1xf32>
    %77 = tpu.reciprocal %76 {approx = true} : vector<2x8x1xf32> -> vector<2x8x1xf32>
    %78 = vector.broadcast %77 : vector<2x8x1xf32> to vector<2x8x8xf32>
    %79 = arith.mulf %74, %78 : vector<2x8x8xf32>
    %80 = arith.truncf %79 : vector<2x8x8xf32> to vector<2x8x8xbf16>
    "tpu.trace_start"() <{level = 10 : i32, message = "bts,bsd->btd"}> : () -> ()
    %cst_33 = arith.constant dense<0.000000e+00> : vector<2x8x8xf32>
    %81 = tpu.matmul %80, %68, %cst_33 {dimension_numbers = #tpu.dot_dimension_numbers<[2], [1], [1], [2], [0, 0, 0, 1, 1, 2], [0], [0]>} : vector<2x8x8xbf16>, vector<2x8x8xbf16>, vector<2x8x8xf32> -> vector<2x8x8xf32>
    "tpu.trace_stop"() : () -> ()
    %82 = vector.shape_cast %81 : vector<2x8x8xf32> to vector<16x8xf32>
    %83 = arith.truncf %82 : vector<16x8xf32> to vector<16x8xbf16>
    %c1 = arith.constant 1 : index
    %c0_34 = arith.constant 0 : index
    %c0_35 = arith.constant 0 : index
    %84 = vector.load %arg8[%c1, %c0_34, %c0_35] : memref<4x8x32xbf16, #tpu.memory_space<vmem>>, vector<1x8x32xbf16>
    %85 = vector.shape_cast %84 : vector<1x8x32xbf16> to vector<8x32xbf16>
    %cst_36 = arith.constant dense<0.000000e+00> : vector<16x32xf32>
    %86 = tpu.matmul %83, %85, %cst_36 {dimension_numbers = #tpu.dot_dimension_numbers<[1], [0], [0], [1], [0, 0, 1, 1], [], []>} : vector<16x8xbf16>, vector<8x32xbf16>, vector<16x32xf32> -> vector<16x32xf32>
    %87 = arith.addf %65, %86 : vector<16x32xf32>
    %88 = vector.extract_strided_slice %42 {offsets = [0, 0, 16], sizes = [2, 8, 8], strides = [1, 1, 1]} : vector<2x8x96xbf16> to vector<2x8x8xbf16>
    %89 = vector.extract_strided_slice %42 {offsets = [0, 0, 48], sizes = [2, 8, 8], strides = [1, 1, 1]} : vector<2x8x96xbf16> to vector<2x8x8xbf16>
    %90 = vector.extract_strided_slice %42 {offsets = [0, 0, 80], sizes = [2, 8, 8], strides = [1, 1, 1]} : vector<2x8x96xbf16> to vector<2x8x8xbf16>
    "tpu.trace_start"() <{level = 10 : i32, message = "btd,bsd->bts"}> : () -> ()
    %cst_37 = arith.constant dense<0.000000e+00> : vector<2x8x8xf32>
    %91 = tpu.matmul %88, %89, %cst_37 {dimension_numbers = #tpu.dot_dimension_numbers<[2], [2], [1], [1], [0, 0, 0, 1, 1, 1], [0], [0]>} : vector<2x8x8xbf16>, vector<2x8x8xbf16>, vector<2x8x8xf32> -> vector<2x8x8xf32>
    "tpu.trace_stop"() : () -> ()
    %cst_38 = arith.constant dense<0xFF800000> : vector<2x8xf32>
    %92 = vector.multi_reduction <maximumf>, %91, %cst_38 [2] : vector<2x8x8xf32> to vector<2x8xf32>
    %93 = vector.shape_cast %92 : vector<2x8xf32> to vector<2x8x1xf32>
    %94 = vector.broadcast %93 : vector<2x8x1xf32> to vector<2x8x8xf32>
    %95 = arith.subf %91, %94 : vector<2x8x8xf32>
    %96 = math.exp %95 : vector<2x8x8xf32>
    %cst_39 = arith.constant dense<0.000000e+00> : vector<2x8xf32>
    %97 = vector.multi_reduction <add>, %96, %cst_39 [2] : vector<2x8x8xf32> to vector<2x8xf32>
    %98 = vector.shape_cast %97 : vector<2x8xf32> to vector<2x8x1xf32>
    %99 = tpu.reciprocal %98 {approx = true} : vector<2x8x1xf32> -> vector<2x8x1xf32>
    %100 = vector.broadcast %99 : vector<2x8x1xf32> to vector<2x8x8xf32>
    %101 = arith.mulf %96, %100 : vector<2x8x8xf32>
    %102 = arith.truncf %101 : vector<2x8x8xf32> to vector<2x8x8xbf16>
    "tpu.trace_start"() <{level = 10 : i32, message = "bts,bsd->btd"}> : () -> ()
    %cst_40 = arith.constant dense<0.000000e+00> : vector<2x8x8xf32>
    %103 = tpu.matmul %102, %90, %cst_40 {dimension_numbers = #tpu.dot_dimension_numbers<[2], [1], [1], [2], [0, 0, 0, 1, 1, 2], [0], [0]>} : vector<2x8x8xbf16>, vector<2x8x8xbf16>, vector<2x8x8xf32> -> vector<2x8x8xf32>
    "tpu.trace_stop"() : () -> ()
    %104 = vector.shape_cast %103 : vector<2x8x8xf32> to vector<16x8xf32>
    %105 = arith.truncf %104 : vector<16x8xf32> to vector<16x8xbf16>
    %c2 = arith.constant 2 : index
    %c0_41 = arith.constant 0 : index
    %c0_42 = arith.constant 0 : index
    %106 = vector.load %arg8[%c2, %c0_41, %c0_42] : memref<4x8x32xbf16, #tpu.memory_space<vmem>>, vector<1x8x32xbf16>
    %107 = vector.shape_cast %106 : vector<1x8x32xbf16> to vector<8x32xbf16>
    %cst_43 = arith.constant dense<0.000000e+00> : vector<16x32xf32>
    %108 = tpu.matmul %105, %107, %cst_43 {dimension_numbers = #tpu.dot_dimension_numbers<[1], [0], [0], [1], [0, 0, 1, 1], [], []>} : vector<16x8xbf16>, vector<8x32xbf16>, vector<16x32xf32> -> vector<16x32xf32>
    %109 = arith.addf %87, %108 : vector<16x32xf32>
    %110 = vector.extract_strided_slice %42 {offsets = [0, 0, 24], sizes = [2, 8, 8], strides = [1, 1, 1]} : vector<2x8x96xbf16> to vector<2x8x8xbf16>
    %111 = vector.extract_strided_slice %42 {offsets = [0, 0, 56], sizes = [2, 8, 8], strides = [1, 1, 1]} : vector<2x8x96xbf16> to vector<2x8x8xbf16>
    %112 = vector.extract_strided_slice %42 {offsets = [0, 0, 88], sizes = [2, 8, 8], strides = [1, 1, 1]} : vector<2x8x96xbf16> to vector<2x8x8xbf16>
    "tpu.trace_start"() <{level = 10 : i32, message = "btd,bsd->bts"}> : () -> ()
    %cst_44 = arith.constant dense<0.000000e+00> : vector<2x8x8xf32>
    %113 = tpu.matmul %110, %111, %cst_44 {dimension_numbers = #tpu.dot_dimension_numbers<[2], [2], [1], [1], [0, 0, 0, 1, 1, 1], [0], [0]>} : vector<2x8x8xbf16>, vector<2x8x8xbf16>, vector<2x8x8xf32> -> vector<2x8x8xf32>
    "tpu.trace_stop"() : () -> ()
    %cst_45 = arith.constant dense<0xFF800000> : vector<2x8xf32>
    %114 = vector.multi_reduction <maximumf>, %113, %cst_45 [2] : vector<2x8x8xf32> to vector<2x8xf32>
    %115 = vector.shape_cast %114 : vector<2x8xf32> to vector<2x8x1xf32>
    %116 = vector.broadcast %115 : vector<2x8x1xf32> to vector<2x8x8xf32>
    %117 = arith.subf %113, %116 : vector<2x8x8xf32>
    %118 = math.exp %117 : vector<2x8x8xf32>
    %cst_46 = arith.constant dense<0.000000e+00> : vector<2x8xf32>
    %119 = vector.multi_reduction <add>, %118, %cst_46 [2] : vector<2x8x8xf32> to vector<2x8xf32>
    %120 = vector.shape_cast %119 : vector<2x8xf32> to vector<2x8x1xf32>
    %121 = tpu.reciprocal %120 {approx = true} : vector<2x8x1xf32> -> vector<2x8x1xf32>
    %122 = vector.broadcast %121 : vector<2x8x1xf32> to vector<2x8x8xf32>
    %123 = arith.mulf %118, %122 : vector<2x8x8xf32>
    %124 = arith.truncf %123 : vector<2x8x8xf32> to vector<2x8x8xbf16>
    "tpu.trace_start"() <{level = 10 : i32, message = "bts,bsd->btd"}> : () -> ()
    %cst_47 = arith.constant dense<0.000000e+00> : vector<2x8x8xf32>
    %125 = tpu.matmul %124, %112, %cst_47 {dimension_numbers = #tpu.dot_dimension_numbers<[2], [1], [1], [2], [0, 0, 0, 1, 1, 2], [0], [0]>} : vector<2x8x8xbf16>, vector<2x8x8xbf16>, vector<2x8x8xf32> -> vector<2x8x8xf32>
    "tpu.trace_stop"() : () -> ()
    %126 = vector.shape_cast %125 : vector<2x8x8xf32> to vector<16x8xf32>
    %127 = arith.truncf %126 : vector<16x8xf32> to vector<16x8xbf16>
    %c3 = arith.constant 3 : index
    %c0_48 = arith.constant 0 : index
    %c0_49 = arith.constant 0 : index
    %128 = vector.load %arg8[%c3, %c0_48, %c0_49] : memref<4x8x32xbf16, #tpu.memory_space<vmem>>, vector<1x8x32xbf16>
    %129 = vector.shape_cast %128 : vector<1x8x32xbf16> to vector<8x32xbf16>
    %cst_50 = arith.constant dense<0.000000e+00> : vector<16x32xf32>
    %130 = tpu.matmul %127, %129, %cst_50 {dimension_numbers = #tpu.dot_dimension_numbers<[1], [0], [0], [1], [0, 0, 1, 1], [], []>} : vector<16x8xbf16>, vector<8x32xbf16>, vector<16x32xf32> -> vector<16x32xf32>
    %131 = arith.addf %109, %130 : vector<16x32xf32>
    %c0_51 = arith.constant 0 : index
    %c0_52 = arith.constant 0 : index
    %132 = vector.load %arg9[%c0_51, %c0_52] : memref<1x32xf32, #tpu.memory_space<vmem>>, vector<1x32xf32>
    %133 = vector.broadcast %132 : vector<1x32xf32> to vector<16x32xf32>
    %134 = arith.addf %131, %133 : vector<16x32xf32>
    %135 = arith.addf %10, %134 : vector<16x32xf32>
    %cst_53 = arith.constant dense<0.000000e+00> : vector<16xf32>
    %136 = vector.multi_reduction <add>, %135, %cst_53 [1] : vector<16x32xf32> to vector<16xf32>
    %137 = vector.shape_cast %136 : vector<16xf32> to vector<16x1xf32>
    %cst_54 = arith.constant 3.200000e+01 : f32
    %138 = vector.broadcast %cst_54 : f32 to vector<16x1xf32>
    %139 = arith.divf %137, %138 : vector<16x1xf32>
    %140 = vector.broadcast %139 : vector<16x1xf32> to vector<16x32xf32>
    %141 = arith.subf %135, %140 : vector<16x32xf32>
    %142 = arith.mulf %141, %141 : vector<16x32xf32>
    %cst_55 = arith.constant dense<0.000000e+00> : vector<16xf32>
    %143 = vector.multi_reduction <add>, %142, %cst_55 [1] : vector<16x32xf32> to vector<16xf32>
    %144 = vector.shape_cast %143 : vector<16xf32> to vector<16x1xf32>
    %cst_56 = arith.constant 3.200000e+01 : f32
    %145 = vector.broadcast %cst_56 : f32 to vector<16x1xf32>
    %146 = arith.divf %144, %145 : vector<16x1xf32>
    %147 = vector.broadcast %139 : vector<16x1xf32> to vector<16x32xf32>
    %148 = arith.subf %135, %147 : vector<16x32xf32>
    %cst_57 = arith.constant 9.99999974E-6 : f32
    %149 = vector.broadcast %cst_57 : f32 to vector<16x1xf32>
    %150 = arith.addf %146, %149 : vector<16x1xf32>
    %151 = math.rsqrt %150 : vector<16x1xf32>
    %152 = vector.broadcast %151 : vector<16x1xf32> to vector<16x32xf32>
    %153 = arith.mulf %148, %152 : vector<16x32xf32>
    %154 = vector.broadcast %11 : vector<1x32xf32> to vector<16x32xf32>
    %155 = arith.mulf %153, %154 : vector<16x32xf32>
    %156 = vector.broadcast %12 : vector<1x32xf32> to vector<16x32xf32>
    %157 = arith.addf %155, %156 : vector<16x32xf32>
    %158 = arith.truncf %157 : vector<16x32xf32> to vector<16x32xbf16>
    %c0_58 = arith.constant 0 : index
    %c0_59 = arith.constant 0 : index
    %159 = vector.load %arg10[%c0_58, %c0_59] : memref<32x128xbf16, #tpu.memory_space<vmem>>, vector<32x128xbf16>
    %cst_60 = arith.constant dense<0.000000e+00> : vector<16x128xf32>
    %160 = tpu.matmul %158, %159, %cst_60 {dimension_numbers = #tpu.dot_dimension_numbers<[1], [0], [0], [1], [0, 0, 1, 1], [], []>} : vector<16x32xbf16>, vector<32x128xbf16>, vector<16x128xf32> -> vector<16x128xf32>
    %c0_61 = arith.constant 0 : index
    %c0_62 = arith.constant 0 : index
    %161 = vector.load %arg11[%c0_61, %c0_62] : memref<1x128xf32, #tpu.memory_space<vmem>>, vector<1x128xf32>
    %162 = vector.broadcast %161 : vector<1x128xf32> to vector<16x128xf32>
    %163 = arith.addf %160, %162 : vector<16x128xf32>
    %c0_63 = arith.constant 0 : index
    %c0_64 = arith.constant 0 : index
    %164 = vector.load %arg12[%c0_63, %c0_64] : memref<16x128xf32, #tpu.memory_space<vmem>>, vector<16x128xf32>
    tpu.vector_store %arg12[%c0_63, %c0_64], %163 {strides = array<i32>} : memref<16x128xf32, #tpu.memory_space<vmem>>, vector<16x128xf32>,
    return
  }
}

</mosaic_0001>

<llo_original>
// kernel: tpu_custom_call.1
$region0: #{tpu_custom_call.1}
  #allocation0 [shape = 'u32[]', space=smem, size = 0x4, offset = 0x4, fixed_abs, tag = 'smem constant byte address 0x4 - core index']
  #allocation1 [shape = 'u32[144,128]{1,0:T(1,128)}', space=vmem, size = 0x12000, scoped, tag = 'internal scratch']
  %s0 = inlined_call_operand.hbm [shape: f32[16,32], index: 0, kind: input, shape index: {}]
  %s1 = inlined_call_operand.vmem [shape: f32[1,32], index: 1, kind: input, shape index: {}]
  %s2 = inlined_call_operand.hbm [shape: bf16[32,32], index: 2, kind: input, shape index: {}]
  %s3 = inlined_call_operand.vmem [shape: f32[1,32], index: 3, kind: input, shape index: {}]
  %s4 = inlined_call_operand.hbm [shape: f32[1,32], index: 4, kind: input, shape index: {}]
  %s5 = inlined_call_operand.hbm [shape: f32[1,32], index: 5, kind: input, shape index: {}]
  %s6 = inlined_call_operand.vmem [shape: bf16[32,96], index: 6, kind: input, shape index: {}]
  %s7 = inlined_call_operand.hbm [shape: f32[1,96], index: 7, kind: input, shape index: {}]
  %s8 = inlined_call_operand.hbm [shape: bf16[4,8,32], index: 8, kind: input, shape index: {}]
  %s9 = inlined_call_operand.hbm [shape: f32[1,32], index: 9, kind: input, shape index: {}]
  %s10 = inlined_call_operand.vmem [shape: bf16[32,128], index: 10, kind: input, shape index: {}]
  %s11 = inlined_call_operand.vmem [shape: f32[1,128], index: 11, kind: input, shape index: {}]
  %s12 = inlined_call_operand.hbm [shape: f32[16,128], index: 12, kind: output, shape index: {}]
  %s13 = sld [smem:[#allocation0]]
  $region86: #{tpu_custom_call.1} parent=0
    _
  %s15 = ssub.s32 1, %s13
  %s16 = scalar_select 0, %s15, %s13
  $region1: #{tpu_custom_call.1} parent=0
    #allocation2 [shape = 'u8[8192]{0}', space=vmem, size = 0x2000, scoped, tag = 'input window, operand 0, single buffered']
    #allocation3 [shape = 's32[1]{0}', space=sflag, size = 0x4, scoped, tag = 'scoped memory for tpu_custom_call.1']
    #allocation4 [shape = 's32[1]{0}', space=sflag, size = 0x4, scoped, tag = 'scoped memory for tpu_custom_call.1']
    #allocation5 [shape = 'u8[8192]{0}', space=vmem, size = 0x2000, scoped, tag = 'input window, operand 2, single buffered']
    #allocation6 [shape = 's32[1]{0}', space=sflag, size = 0x4, scoped, tag = 'scoped memory for tpu_custom_call.1']
    #allocation7 [shape = 'u8[512]{0}', space=vmem, size = 0x400, scoped, tag = 'input window, operand 4, single buffered']
    #allocation8 [shape = 'u8[512]{0}', space=vmem, size = 0x400, scoped, tag = 'input window, operand 5, single buffered']
    #allocation9 [shape = 's32[1]{0}', space=sflag, size = 0x4, scoped, tag = 'scoped memory for tpu_custom_call.1']
    #allocation10 [shape = 'u8[512]{0}', space=vmem, size = 0x400, scoped, tag = 'input window, operand 7, single buffered']
    #allocation11 [shape = 'u8[8192]{0}', space=vmem, size = 0x2000, scoped, tag = 'input window, operand 8, single buffered']
    #allocation12 [shape = 's32[1]{0}', space=sflag, size = 0x4, scoped, tag = 'scoped memory for tpu_custom_call.1']
    #allocation13 [shape = 'u8[512]{0}', space=vmem, size = 0x400, scoped, tag = 'input window, operand 9, single buffered']
    #allocation14 [shape = 'u8[8192]{0}', space=vmem, size = 0x2000, scoped, tag = 'output window, operand 0, single buffered']
    %17 = vsyncpa [#allocation3], 0
    %18 = vsyncpa [#allocation6], 0
    %19 = vsyncpa [#allocation9], 0
    %20 = vsyncpa [#allocation12], 0
    %21 = vsyncpa [#allocation4], 0
    // Predicated region
    $region2: #{tpu_custom_call.1} parent=1 // pred_check
      _
    $region3: #{tpu_custom_call.1} parent=1 // pred_check_branch
      %23 = sbr.rel (0) target = $region5
    $region4: #{tpu_custom_call.1} parent=1 // pred_region
      %s25 = ssub.s32 256, 256
      %26 = vsyncadd [#allocation3], %s25
      %s27 = sshll.u32 [#allocation2], 4
      %s28 = int_to_ptr.vmem [resolvable:$true] %s27
      %33 = dma.hbm_to_vmem [thread:$0]  %s0, 256, %s28, [#allocation3], 128, 128, 8
    $region5: #{tpu_custom_call.1} parent=1 // pred_fallthru
      _
    // Predicated region
    $region6: #{tpu_custom_call.1} parent=1 // pred_check
      _
    $region7: #{tpu_custom_call.1} parent=1 // pred_check_branch
      %35 = sbr.rel (0) target = $region9
    $region8: #{tpu_custom_call.1} parent=1 // pred_region
      _
    $region9: #{tpu_custom_call.1} parent=1 // pred_fallthru
      _
    // Predicated region
    $region10: #{tpu_custom_call.1} parent=1 // pred_check
      _
    $region11: #{tpu_custom_call.1} parent=1 // pred_check_branch
      %37 = sbr.rel (0) target = $region13
    $region12: #{tpu_custom_call.1} parent=1 // pred_region
      %s39 = ssub.s32 256, 256
      %40 = vsyncadd [#allocation6], %s39
      %s41 = sshll.u32 [#allocation5], 4
      %s42 = int_to_ptr.vmem [resolvable:$true] %s41
      %47 = dma.hbm_to_vmem [thread:$0]  %s2, 256, %s42, [#allocation6], 64, 64, 4
    $region13: #{tpu_custom_call.1} parent=1 // pred_fallthru
      _
    // Predicated region
    $region14: #{tpu_custom_call.1} parent=1 // pred_check
      _
    $region15: #{tpu_custom_call.1} parent=1 // pred_check_branch
      %49 = sbr.rel (0) target = $region17
    $region16: #{tpu_custom_call.1} parent=1 // pred_region
      _
    $region17: #{tpu_custom_call.1} parent=1 // pred_fallthru
      _
    // Predicated region
    $region18: #{tpu_custom_call.1} parent=1 // pred_check
      _
    $region19: #{tpu_custom_call.1} parent=1 // pred_check_branch
      %51 = sbr.rel (0) target = $region21
    $region20: #{tpu_custom_call.1} parent=1 // pred_region
      %s53 = ssub.s32 16, 16
      %54 = vsyncadd [#allocation6], %s53
      %s56 = sshll.u32 [#allocation7], 4
      %s57 = int_to_ptr.vmem [resolvable:$true] %s56
      %59 = dma.hbm_to_vmem [thread:$0]  %s4, 16, %s57, [#allocation6]
    $region21: #{tpu_custom_call.1} parent=1 // pred_fallthru
      _
    // Predicated region
    $region22: #{tpu_custom_call.1} parent=1 // pred_check
      _
    $region23: #{tpu_custom_call.1} parent=1 // pred_check_branch
      %61 = sbr.rel (0) target = $region25
    $region24: #{tpu_custom_call.1} parent=1 // pred_region
      %s63 = ssub.s32 16, 16
      %64 = vsyncadd [#allocation9], %s63
      %s66 = sshll.u32 [#allocation8], 4
      %s67 = int_to_ptr.vmem [resolvable:$true] %s66
      %69 = dma.hbm_to_vmem [thread:$0]  %s5, 16, %s67, [#allocation9]
    $region25: #{tpu_custom_call.1} parent=1 // pred_fallthru
      _
    // Predicated region
    $region26: #{tpu_custom_call.1} parent=1 // pred_check
      _
    $region27: #{tpu_custom_call.1} parent=1 // pred_check_branch
      %71 = sbr.rel (0) target = $region29
    $region28: #{tpu_custom_call.1} parent=1 // pred_region
      _
    $region29: #{tpu_custom_call.1} parent=1 // pred_fallthru
      _
    // Predicated region
    $region30: #{tpu_custom_call.1} parent=1 // pred_check
      _
    $region31: #{tpu_custom_call.1} parent=1 // pred_check_branch
      %73 = sbr.rel (0) target = $region33
    $region32: #{tpu_custom_call.1} parent=1 // pred_region
      %s75 = ssub.s32 16, 16
      %76 = vsyncadd [#allocation9], %s75
      %s78 = sshll.u32 [#allocation10], 4
      %s79 = int_to_ptr.vmem [resolvable:$true] %s78
      %81 = dma.hbm_to_vmem [thread:$0]  %s7, 16, %s79, [#allocation9]
    $region33: #{tpu_custom_call.1} parent=1 // pred_fallthru
      _
    // Predicated region
    $region34: #{tpu_custom_call.1} parent=1 // pred_check
      _
    $region35: #{tpu_custom_call.1} parent=1 // pred_check_branch
      %83 = sbr.rel (0) target = $region37
    $region36: #{tpu_custom_call.1} parent=1 // pred_region
      %s85 = ssub.s32 256, 256
      %86 = vsyncadd [#allocation12], %s85
      %s87 = sshll.u32 [#allocation11], 4
      %s88 = int_to_ptr.vmem [resolvable:$true] %s87
      %93 = dma.hbm_to_vmem [thread:$0]  %s8, 256, %s88, [#allocation12], 64, 64, 4
    $region37: #{tpu_custom_call.1} parent=1 // pred_fallthru
      _
    // Predicated region
    $region38: #{tpu_custom_call.1} parent=1 // pred_check
      _
    $region39: #{tpu_custom_call.1} parent=1 // pred_check_branch
      %95 = sbr.rel (0) target = $region41
    $region40: #{tpu_custom_call.1} parent=1 // pred_region
      %s97 = ssub.s32 16, 16
      %98 = vsyncadd [#allocation12], %s97
      %s100 = sshll.u32 [#allocation13], 4
      %s101 = int_to_ptr.vmem [resolvable:$true] %s100
      %103 = dma.hbm_to_vmem [thread:$0]  %s9, 16, %s101, [#allocation12]
    $region41: #{tpu_custom_call.1} parent=1 // pred_fallthru
      _
    // Predicated region
    $region42: #{tpu_custom_call.1} parent=1 // pred_check
      _
    $region43: #{tpu_custom_call.1} parent=1 // pred_check_branch
      %105 = sbr.rel (0) target = $region45
    $region44: #{tpu_custom_call.1} parent=1 // pred_region
      _
    $region45: #{tpu_custom_call.1} parent=1 // pred_fallthru
      _
    // Predicated region
    $region46: #{tpu_custom_call.1} parent=1 // pred_check
      _
    $region47: #{tpu_custom_call.1} parent=1 // pred_check_branch
      %107 = sbr.rel (0) target = $region49
    $region48: #{tpu_custom_call.1} parent=1 // pred_region
      _
    $region49: #{tpu_custom_call.1} parent=1 // pred_fallthru
      _
    // Predicated region
    $region50: #{tpu_custom_call.1} parent=1 // pred_check
      _
    $region51: #{tpu_custom_call.1} parent=1 // pred_check_branch
      %109 = sbr.rel (0) target = $region53
    $region52: #{tpu_custom_call.1} parent=1 // pred_region
      %110 = dma.done [#allocation3], 256
    $region53: #{tpu_custom_call.1} parent=1 // pred_fallthru
      _
    // Predicated region
    $region54: #{tpu_custom_call.1} parent=1 // pred_check
      _
    $region55: #{tpu_custom_call.1} parent=1 // pred_check_branch
      %112 = sbr.rel (0) target = $region57
    $region56: #{tpu_custom_call.1} parent=1 // pred_region
      %113 = dma.done [#allocation6], 256
    $region57: #{tpu_custom_call.1} parent=1 // pred_fallthru
      _
    // Predicated region
    $region58: #{tpu_custom_call.1} parent=1 // pred_check
      _
    $region59: #{tpu_custom_call.1} parent=1 // pred_check_branch
      %115 = sbr.rel (0) target = $region61
    $region60: #{tpu_custom_call.1} parent=1 // pred_region
      %116 = dma.done [#allocation6], 16
    $region61: #{tpu_custom_call.1} parent=1 // pred_fallthru
      _
    // Predicated region
    $region62: #{tpu_custom_call.1} parent=1 // pred_check
      _
    $region63: #{tpu_custom_call.1} parent=1 // pred_check_branch
      %118 = sbr.rel (0) target = $region65
    $region64: #{tpu_custom_call.1} parent=1 // pred_region
      %119 = dma.done [#allocation9], 16
    $region65: #{tpu_custom_call.1} parent=1 // pred_fallthru
      _
    // Predicated region
    $region66: #{tpu_custom_call.1} parent=1 // pred_check
      _
    $region67: #{tpu_custom_call.1} parent=1 // pred_check_branch
      %121 = sbr.rel (0) target = $region69
    $region68: #{tpu_custom_call.1} parent=1 // pred_region
      %122 = dma.done [#allocation9], 16
    $region69: #{tpu_custom_call.1} parent=1 // pred_fallthru
      _
    // Predicated region
    $region70: #{tpu_custom_call.1} parent=1 // pred_check
      _
    $region71: #{tpu_custom_call.1} parent=1 // pred_check_branch
      %124 = sbr.rel (0) target = $region73
    $region72: #{tpu_custom_call.1} parent=1 // pred_region
      %125 = dma.done [#allocation12], 256
    $region73: #{tpu_custom_call.1} parent=1 // pred_fallthru
      _
    // Predicated region
    $region74: #{tpu_custom_call.1} parent=1 // pred_check
      _
    $region75: #{tpu_custom_call.1} parent=1 // pred_check_branch
      %127 = sbr.rel (0) target = $region77
    $region76: #{tpu_custom_call.1} parent=1 // pred_region
      %128 = dma.done [#allocation12], 16
    $region77: #{tpu_custom_call.1} parent=1 // pred_fallthru
      _
    %v130 = vld [vmem:[#allocation2] sm:$0xff]
    %v131 = vld [vmem:[#allocation2 + $0x8] sm:$0xff]
    %v132 = vld [vmem:[%s1] sm:$0x1]
    %v134 = vlaneseq
    %v135 = vshrl.u32 %v134, 7
    %v136 = vsub.s32 0, %v135
    %v137 = vrot.slane %v132, %v136
    %v139 = vmul.f32 %v130, %v137
    %v140 = vmul.f32 %v131, %v137
    %v141 = vpack.c.bf16 %v140, %v139
    %v142 = vld [vmem:[#allocation5] sm:$0xf]
    %v143 = vld [vmem:[#allocation5 + $0x4] sm:$0xf]
    %v144 = vld [vmem:[#allocation5 + $0x8] sm:$0xf]
    %v145 = vld [vmem:[#allocation5 + $0xc] sm:$0xf]
    %v146 = vld [vmem:[%s3] sm:$0x1]
    %v148 = vlaneseq
    %v149 = vshrl.u32 %v148, 7
    %v150 = vsub.s32 0, %v149
    %v151 = vrot.slane %v146, %v150
    %v157 = vunpack.c.l.b16 %v142
    %v158 = vunpack.c.l.b16 %v143
    %v159 = vunpack.c.l.b16 %v144
    %v160 = vunpack.c.l.b16 %v145
    %v161 = vpack.c.b16 %v158, %v157
    %v162 = vpack.c.b16 %v160, %v159
    %vm165 = vcmask 261120
    %v167 = vsel %vm165, %v141, 0
    %169 = vmatprep.subr.bf16.mxu0 0
    %170 = vmatpush1.bf16.msra.mxu0 %v161
    %171 = vmatprep.subr.bf16.mxu0 0
    %172 = vmatpush1.bf16.msra.mxu0 %v162
    %173 = vmatprep.subr.bf16.mxu0 0
    %174 = vmatpush1.bf16.msra.mxu0 0
    %175 = vmatprep.subr.bf16.mxu0 0
    %176 = vmatpush1.bf16.msra.mxu0 0
    %177 = vmatprep.subr.bf16.mxu0 0
    %178 = vmatpush1.bf16.msra.mxu0 0
    %179 = vmatprep.subr.bf16.mxu0 0
    %180 = vmatpush1.bf16.msra.mxu0 0
    %181 = vmatprep.subr.bf16.mxu0 0
    %182 = vmatpush1.bf16.msra.mxu0 0
    %183 = vmatprep.subr.bf16.mxu0 0
    %184 = vmatpush1.bf16.msra.mxu0 0
    %185 = vmatprep.subr.bf16.mxu0 0
    %186 = vmatpush1.bf16.msra.mxu0 0
    %187 = vmatprep.subr.bf16.mxu0 0
    %188 = vmatpush1.bf16.msra.mxu0 0
    %189 = vmatprep.subr.bf16.mxu0 0
    %190 = vmatpush1.bf16.msra.mxu0 0
    %191 = vmatprep.subr.bf16.mxu0 0
    %192 = vmatpush1.bf16.msra.mxu0 0
    %193 = vmatprep.subr.bf16.mxu0 0
    %194 = vmatpush1.bf16.msra.mxu0 0
    %195 = vmatprep.subr.bf16.mxu0 0
    %196 = vmatpush1.bf16.msra.mxu0 0
    %197 = vmatprep.subr.bf16.mxu0 0
    %198 = vmatpush1.bf16.msra.mxu0 0
    %199 = vmatprep.subr.bf16.mxu0 0
    %200 = vmatpush1.bf16.msra.mxu0 0
    %201 = vmatprep.mubr.bf16.mxu0 0
    %202 = vmatmul.mubr.bf16.gmra.mrb[0].mxu0 %v167
    %v203 = vpop.f32.mrb[0].mxu0
    %v204 = vadd.f32 %v151, %v203
    %v205 = vpop.f32.mrb[0].mxu0
    %v206 = vpop.f32.mrb[0].mxu0
    %v207 = vadd.f32 %v151, %v206
    %v208 = vpop.f32.mrb[0].mxu0
    %209 = vdwg.mxu0
    %v210 = vtanh.pop %v204
    %v211 = vtanh.pop %v207
    %v212 = vld [vmem:[#allocation7] sm:$0x1]
    %v213 = vld [vmem:[#allocation8] sm:$0x1]
    %v214 = vsel %vm165, %v210, 0.0
    %215 = vadd.xlane.f32.xlu0 %v214
    %v216 = vpop.xlane.xlu0 %215
    %v217 = vsel %vm165, %v211, 0.0
    %218 = vadd.xlane.f32.xlu0 %v217
    %v219 = vpop.xlane.xlu0 %218
    %v220 = vrcp.pop 32.0
    %v221 = vmul.f32 %v216, %v220
    %v222 = vmul.f32 %v219, %v220
    %v223 = vsub.f32 %v210, %v221
    %v224 = vsub.f32 %v211, %v222
    %v225 = vmul.f32 %v223, %v223
    %v226 = vmul.f32 %v224, %v224
    %v227 = vsel %vm165, %v225, 0.0
    %228 = vadd.xlane.f32.xlu0 %v227
    %v229 = vpop.xlane.xlu0 %228
    %v230 = vsel %vm165, %v226, 0.0
    %231 = vadd.xlane.f32.xlu0 %v230
    %v232 = vpop.xlane.xlu0 %231
    %v233 = vmul.f32 %v229, %v220
    %v234 = vmul.f32 %v232, %v220
    %v235 = vadd.f32 %v233, 1e-05
    %v236 = vadd.f32 %v234, 1e-05
    %v237 = vrsqrt.pop %v235
    %v238 = vrsqrt.pop %v236
    %v239 = vmul.f32 %v223, %v237
    %v240 = vmul.f32 %v224, %v238
    %v242 = vlaneseq
    %v243 = vshrl.u32 %v242, 7
    %v244 = vsub.s32 0, %v243
    %v245 = vrot.slane %v212, %v244
    %v247 = vmul.f32 %v239, %v245
    %v248 = vmul.f32 %v240, %v245
    %v250 = vlaneseq
    %v251 = vshrl.u32 %v250, 7
    %v252 = vsub.s32 0, %v251
    %v253 = vrot.slane %v213, %v252
    %v255 = vadd.f32 %v247, %v253
    %v256 = vadd.f32 %v248, %v253
    %v257 = vpack.c.bf16 %v256, %v255
    %v258 = vld [vmem:[%s6] sm:$0xf]
    %v259 = vld [vmem:[%s6 + $0x4] sm:$0xf]
    %v260 = vld [vmem:[%s6 + $0x8] sm:$0xf]
    %v261 = vld [vmem:[%s6 + $0xc] sm:$0xf]
    %v262 = vld [vmem:[#allocation10] sm:$0x1]
    %v264 = vlaneseq
    %v265 = vshrl.u32 %v264, 7
    %v266 = vsub.s32 0, %v265
    %v267 = vrot.slane %v262, %v266
    %v273 = vunpack.c.l.b16 %v258
    %v274 = vunpack.c.l.b16 %v259
    %v275 = vunpack.c.l.b16 %v260
    %v276 = vunpack.c.l.b16 %v261
    %v277 = vpack.c.b16 %v274, %v273
    %v278 = vpack.c.b16 %v276, %v275
    %v282 = vsel %vm165, %v257, 0
    %284 = vmatprep.subr.bf16.mxu0 0
    %285 = vmatpush1.bf16.msra.mxu0 %v277
    %286 = vmatprep.subr.bf16.mxu0 0
    %287 = vmatpush1.bf16.msra.mxu0 %v278
    %288 = vmatprep.subr.bf16.mxu0 0
    %289 = vmatpush1.bf16.msra.mxu0 0
    %290 = vmatprep.subr.bf16.mxu0 0
    %291 = vmatpush1.bf16.msra.mxu0 0
    %292 = vmatprep.subr.bf16.mxu0 0
    %293 = vmatpush1.bf16.msra.mxu0 0
    %294 = vmatprep.subr.bf16.mxu0 0
    %295 = vmatpush1.bf16.msra.mxu0 0
    %296 = vmatprep.subr.bf16.mxu0 0
    %297 = vmatpush1.bf16.msra.mxu0 0
    %298 = vmatprep.subr.bf16.mxu0 0
    %299 = vmatpush1.bf16.msra.mxu0 0
    %300 = vmatprep.subr.bf16.mxu0 0
    %301 = vmatpush1.bf16.msra.mxu0 0
    %302 = vmatprep.subr.bf16.mxu0 0
    %303 = vmatpush1.bf16.msra.mxu0 0
    %304 = vmatprep.subr.bf16.mxu0 0
    %305 = vmatpush1.bf16.msra.mxu0 0
    %306 = vmatprep.subr.bf16.mxu0 0
    %307 = vmatpush1.bf16.msra.mxu0 0
    %308 = vmatprep.subr.bf16.mxu0 0
    %309 = vmatpush1.bf16.msra.mxu0 0
    %310 = vmatprep.subr.bf16.mxu0 0
    %311 = vmatpush1.bf16.msra.mxu0 0
    %312 = vmatprep.subr.bf16.mxu0 0
    %313 = vmatpush1.bf16.msra.mxu0 0
    %314 = vmatprep.subr.bf16.mxu0 0
    %315 = vmatpush1.bf16.msra.mxu0 0
    %316 = vmatprep.mubr.bf16.mxu0 0
    %317 = vmatmul.mubr.bf16.gmra.mrb[0].mxu0 %v282
    %v318 = vpop.f32.mrb[0].mxu0
    %v319 = vadd.f32 %v267, %v318
    %v320 = vpop.f32.mrb[0].mxu0
    %v321 = vpop.f32.mrb[0].mxu0
    %v322 = vadd.f32 %v267, %v321
    %v323 = vpop.f32.mrb[0].mxu0
    %324 = vdwg.mxu0
    %v325 = vpack.c.bf16 %v319, %v319
    %v326 = vpack.c.bf16 %v322, %v322
    %328 = vrot.lane.b32.xlu0 %v325, 96
    %v329 = vpop.permute.xlu0 %328
    %vm330 = vcmask 64512
    %v332 = vsel %vm330, %v325, 0
    %v335 = vsel %vm330, %v329, 0
    %337 = vmatprep.subr.bf16.mxu0 0
    %338 = vmatpush1.bf16.xpose.msra.mxu0 %v335
    %339 = vmatprep.subr.bf16.mxu0 0
    %340 = vmatpush1.bf16.xpose.msra.mxu0 0
    %341 = vmatprep.subr.bf16.mxu0 0
    %342 = vmatpush1.bf16.xpose.msra.mxu0 0
    %343 = vmatprep.subr.bf16.mxu0 0
    %344 = vmatpush1.bf16.xpose.msra.mxu0 0
    %345 = vmatprep.subr.bf16.mxu0 0
    %346 = vmatpush1.bf16.xpose.msra.mxu0 0
    %347 = vmatprep.subr.bf16.mxu0 0
    %348 = vmatpush1.bf16.xpose.msra.mxu0 0
    %349 = vmatprep.subr.bf16.mxu0 0
    %350 = vmatpush1.bf16.xpose.msra.mxu0 0
    %351 = vmatprep.subr.bf16.mxu0 0
    %352 = vmatpush1.bf16.xpose.msra.mxu0 0
    %353 = vmatprep.subr.bf16.mxu0 0
    %354 = vmatpush1.bf16.xpose.msra.mxu0 0
    %355 = vmatprep.subr.bf16.mxu0 0
    %356 = vmatpush1.bf16.xpose.msra.mxu0 0
    %357 = vmatprep.subr.bf16.mxu0 0
    %358 = vmatpush1.bf16.xpose.msra.mxu0 0
    %359 = vmatprep.subr.bf16.mxu0 0
    %360 = vmatpush1.bf16.xpose.msra.mxu0 0
    %361 = vmatprep.subr.bf16.mxu0 0
    %362 = vmatpush1.bf16.xpose.msra.mxu0 0
    %363 = vmatprep.subr.bf16.mxu0 0
    %364 = vmatpush1.bf16.xpose.msra.mxu0 0
    %365 = vmatprep.subr.bf16.mxu0 0
    %366 = vmatpush1.bf16.xpose.msra.mxu0 0
    %367 = vmatprep.subr.bf16.mxu0 0
    %368 = vmatpush1.bf16.xpose.msra.mxu0 0
    %369 = vmatprep.mubr.bf16.mxu0 0
    %370 = vmatmul.mubr.bf16.gmra.mrb[0].mxu0 %v332
    %v371 = vpop.f32.mrb[0].mxu0
    %v372 = vadd.f32 0.0, %v371
    %v373 = vpop.f32.mrb[0].mxu0
    %v374 = vpop.f32.mrb[0].mxu0
    %v375 = vpop.f32.mrb[0].mxu0
    %376 = vdwg.mxu0
    %378 = vrot.lane.b32.xlu0 %v326, 96
    %v379 = vpop.permute.xlu0 %378
    %v381 = vsel %vm330, %v326, 0
    %v384 = vsel %vm330, %v379, 0
    %386 = vmatprep.subr.bf16.mxu0 0
    %387 = vmatpush1.bf16.xpose.msra.mxu0 %v384
    %388 = vmatprep.subr.bf16.mxu0 0
    %389 = vmatpush1.bf16.xpose.msra.mxu0 0
    %390 = vmatprep.subr.bf16.mxu0 0
    %391 = vmatpush1.bf16.xpose.msra.mxu0 0
    %392 = vmatprep.subr.bf16.mxu0 0
    %393 = vmatpush1.bf16.xpose.msra.mxu0 0
    %394 = vmatprep.subr.bf16.mxu0 0
    %395 = vmatpush1.bf16.xpose.msra.mxu0 0
    %396 = vmatprep.subr.bf16.mxu0 0
    %397 = vmatpush1.bf16.xpose.msra.mxu0 0
    %398 = vmatprep.subr.bf16.mxu0 0
    %399 = vmatpush1.bf16.xpose.msra.mxu0 0
    %400 = vmatprep.subr.bf16.mxu0 0
    %401 = vmatpush1.bf16.xpose.msra.mxu0 0
    %402 = vmatprep.subr.bf16.mxu0 0
    %403 = vmatpush1.bf16.xpose.msra.mxu0 0
    %404 = vmatprep.subr.bf16.mxu0 0
    %405 = vmatpush1.bf16.xpose.msra.mxu0 0
    %406 = vmatprep.subr.bf16.mxu0 0
    %407 = vmatpush1.bf16.xpose.msra.mxu0 0
    %408 = vmatprep.subr.bf16.mxu0 0
    %409 = vmatpush1.bf16.xpose.msra.mxu0 0
    %410 = vmatprep.subr.bf16.mxu0 0
    %411 = vmatpush1.bf16.xpose.msra.mxu0 0
    %412 = vmatprep.subr.bf16.mxu0 0
    %413 = vmatpush1.bf16.xpose.msra.mxu0 0
    %414 = vmatprep.subr.bf16.mxu0 0
    %415 = vmatpush1.bf16.xpose.msra.mxu0 0
    %416 = vmatprep.subr.bf16.mxu0 0
    %417 = vmatpush1.bf16.xpose.msra.mxu0 0
    %418 = vmatprep.mubr.bf16.mxu0 0
    %419 = vmatmul.mubr.bf16.gmra.mrb[0].mxu0 %v381
    %v420 = vpop.f32.mrb[0].mxu0
    %v421 = vadd.f32 0.0, %v420
    %v422 = vpop.f32.mrb[0].mxu0
    %v423 = vpop.f32.mrb[0].mxu0
    %v424 = vpop.f32.mrb[0].mxu0
    %425 = vdwg.mxu0
    %v426 = vsel %vm330, %v372, -inf
    %427 = vmax.xlane.f32.xlu0 %v426
    %v428 = vpop.xlane.xlu0 %427
    %v429 = vsel %vm330, %v421, -inf
    %430 = vmax.xlane.f32.xlu0 %v429
    %v431 = vpop.xlane.xlu0 %430
    %v432 = vsub.f32 %v372, %v428
    %v433 = vsub.f32 %v421, %v431
    %v434 = vmul.f32 %v432, 1.442695
    %v435 = vpow.pop %v434
    %v436 = vmul.f32 %v433, 1.442695
    %v437 = vpow.pop %v436
    %v438 = vsel %vm330, %v435, 0.0
    %439 = vadd.xlane.f32.xlu0 %v438
    %v440 = vpop.xlane.xlu0 %439
    %v441 = vsel %vm330, %v437, 0.0
    %442 = vadd.xlane.f32.xlu0 %v441
    %v443 = vpop.xlane.xlu0 %442
    %v444 = vrcp.pop %v440
    %v445 = vrcp.pop %v443
    %v446 = vmul.f32 %v435, %v444
    %v447 = vmul.f32 %v437, %v445
    %v448 = vpack.c.bf16 %v446, %v446
    %v449 = vpack.c.bf16 %v447, %v447
    %450 = vrot.lane.b32.xlu0 %v325, 64
    %v451 = vpop.permute.xlu0 %450
    %v453 = vsel %vm330, %v448, 0
    %vm455 = vcmask 1043456
    %v457 = vsel %vm455, %v451, 0
    %459 = vmatprep.subr.bf16.mxu0 0
    %460 = vmatpush1.bf16.msra.mxu0 %v457
    %461 = vmatprep.subr.bf16.mxu0 0
    %462 = vmatpush1.bf16.msra.mxu0 0
    %463 = vmatprep.subr.bf16.mxu0 0
    %464 = vmatpush1.bf16.msra.mxu0 0
    %465 = vmatprep.subr.bf16.mxu0 0
    %466 = vmatpush1.bf16.msra.mxu0 0
    %467 = vmatprep.subr.bf16.mxu0 0
    %468 = vmatpush1.bf16.msra.mxu0 0
    %469 = vmatprep.subr.bf16.mxu0 0
    %470 = vmatpush1.bf16.msra.mxu0 0
    %471 = vmatprep.subr.bf16.mxu0 0
    %472 = vmatpush1.bf16.msra.mxu0 0
    %473 = vmatprep.subr.bf16.mxu0 0
    %474 = vmatpush1.bf16.msra.mxu0 0
    %475 = vmatprep.subr.bf16.mxu0 0
    %476 = vmatpush1.bf16.msra.mxu0 0
    %477 = vmatprep.subr.bf16.mxu0 0
    %478 = vmatpush1.bf16.msra.mxu0 0
    %479 = vmatprep.subr.bf16.mxu0 0
    %480 = vmatpush1.bf16.msra.mxu0 0
    %481 = vmatprep.subr.bf16.mxu0 0
    %482 = vmatpush1.bf16.msra.mxu0 0
    %483 = vmatprep.subr.bf16.mxu0 0
    %484 = vmatpush1.bf16.msra.mxu0 0
    %485 = vmatprep.subr.bf16.mxu0 0
    %486 = vmatpush1.bf16.msra.mxu0 0
    %487 = vmatprep.subr.bf16.mxu0 0
    %488 = vmatpush1.bf16.msra.mxu0 0
    %489 = vmatprep.subr.bf16.mxu0 0
    %490 = vmatpush1.bf16.msra.mxu0 0
    %491 = vmatprep.mubr.bf16.mxu0 0
    %492 = vmatmul.mubr.bf16.gmra.mrb[0].mxu0 %v453
    %v493 = vpop.f32.mrb[0].mxu0
    %v494 = vadd.f32 0.0, %v493
    %v495 = vpop.f32.mrb[0].mxu0
    %v496 = vpop.f32.mrb[0].mxu0
    %v497 = vpop.f32.mrb[0].mxu0
    %498 = vdwg.mxu0
    %499 = vrot.lane.b32.xlu0 %v326, 64
    %v500 = vpop.permute.xlu0 %499
    %v502 = vsel %vm330, %v449, 0
    %v505 = vsel %vm455, %v500, 0
    %507 = vmatprep.subr.bf16.mxu0 0
    %508 = vmatpush1.bf16.msra.mxu0 %v505
    %509 = vmatprep.subr.bf16.mxu0 0
    %510 = vmatpush1.bf16.msra.mxu0 0
    %511 = vmatprep.subr.bf16.mxu0 0
    %512 = vmatpush1.bf16.msra.mxu0 0
    %513 = vmatprep.subr.bf16.mxu0 0
    %514 = vmatpush1.bf16.msra.mxu0 0
    %515 = vmatprep.subr.bf16.mxu0 0
    %516 = vmatpush1.bf16.msra.mxu0 0
    %517 = vmatprep.subr.bf16.mxu0 0
    %518 = vmatpush1.bf16.msra.mxu0 0
    %519 = vmatprep.subr.bf16.mxu0 0
    %520 = vmatpush1.bf16.msra.mxu0 0
    %521 = vmatprep.subr.bf16.mxu0 0
    %522 = vmatpush1.bf16.msra.mxu0 0
    %523 = vmatprep.subr.bf16.mxu0 0
    %524 = vmatpush1.bf16.msra.mxu0 0
    %525 = vmatprep.subr.bf16.mxu0 0
    %526 = vmatpush1.bf16.msra.mxu0 0
    %527 = vmatprep.subr.bf16.mxu0 0
    %528 = vmatpush1.bf16.msra.mxu0 0
    %529 = vmatprep.subr.bf16.mxu0 0
    %530 = vmatpush1.bf16.msra.mxu0 0
    %531 = vmatprep.subr.bf16.mxu0 0
    %532 = vmatpush1.bf16.msra.mxu0 0
    %533 = vmatprep.subr.bf16.mxu0 0
    %534 = vmatpush1.bf16.msra.mxu0 0
    %535 = vmatprep.subr.bf16.mxu0 0
    %536 = vmatpush1.bf16.msra.mxu0 0
    %537 = vmatprep.subr.bf16.mxu0 0
    %538 = vmatpush1.bf16.msra.mxu0 0
    %539 = vmatprep.mubr.bf16.mxu0 0
    %540 = vmatmul.mubr.bf16.gmra.mrb[0].mxu0 %v502
    %v541 = vpop.f32.mrb[0].mxu0
    %v542 = vadd.f32 0.0, %v541
    %v543 = vpop.f32.mrb[0].mxu0
    %v544 = vpop.f32.mrb[0].mxu0
    %v545 = vpop.f32.mrb[0].mxu0
    %546 = vdwg.mxu0
    %v547 = vpack.c.bf16 %v542, %v494
    %v548 = vld [vmem:[#allocation11] sm:$0xf]
    %549 = vrot.lane.b32.xlu0 %v325, 120
    %v550 = vpop.permute.xlu0 %549
    %551 = vrot.lane.b32.xlu0 %v325, 88
    %v552 = vpop.permute.xlu0 %551
    %v554 = vsel %vm330, %v550, 0
    %v557 = vsel %vm330, %v552, 0
    %559 = vmatprep.subr.bf16.mxu0 0
    %560 = vmatpush1.bf16.xpose.msra.mxu0 %v557
    %561 = vmatprep.subr.bf16.mxu0 0
    %562 = vmatpush1.bf16.xpose.msra.mxu0 0
    %563 = vmatprep.subr.bf16.mxu0 0
    %564 = vmatpush1.bf16.xpose.msra.mxu0 0
    %565 = vmatprep.subr.bf16.mxu0 0
    %566 = vmatpush1.bf16.xpose.msra.mxu0 0
    %567 = vmatprep.subr.bf16.mxu0 0
    %568 = vmatpush1.bf16.xpose.msra.mxu0 0
    %569 = vmatprep.subr.bf16.mxu0 0
    %570 = vmatpush1.bf16.xpose.msra.mxu0 0
    %571 = vmatprep.subr.bf16.mxu0 0
    %572 = vmatpush1.bf16.xpose.msra.mxu0 0
    %573 = vmatprep.subr.bf16.mxu0 0
    %574 = vmatpush1.bf16.xpose.msra.mxu0 0
    %575 = vmatprep.subr.bf16.mxu0 0
    %576 = vmatpush1.bf16.xpose.msra.mxu0 0
    %577 = vmatprep.subr.bf16.mxu0 0
    %578 = vmatpush1.bf16.xpose.msra.mxu0 0
    %579 = vmatprep.subr.bf16.mxu0 0
    %580 = vmatpush1.bf16.xpose.msra.mxu0 0
    %581 = vmatprep.subr.bf16.mxu0 0
    %582 = vmatpush1.bf16.xpose.msra.mxu0 0
    %583 = vmatprep.subr.bf16.mxu0 0
    %584 = vmatpush1.bf16.xpose.msra.mxu0 0
    %585 = vmatprep.subr.bf16.mxu0 0
    %586 = vmatpush1.bf16.xpose.msra.mxu0 0
    %587 = vmatprep.subr.bf16.mxu0 0
    %588 = vmatpush1.bf16.xpose.msra.mxu0 0
    %589 = vmatprep.subr.bf16.mxu0 0
    %590 = vmatpush1.bf16.xpose.msra.mxu0 0
    %591 = vmatprep.mubr.bf16.mxu0 0
    %592 = vmatmul.mubr.bf16.gmra.mrb[0].mxu0 %v554
    %v593 = vpop.f32.mrb[0].mxu0
    %v594 = vadd.f32 0.0, %v593
    %v595 = vpop.f32.mrb[0].mxu0
    %v596 = vpop.f32.mrb[0].mxu0
    %v597 = vpop.f32.mrb[0].mxu0
    %598 = vdwg.mxu0
    %599 = vrot.lane.b32.xlu0 %v326, 120
    %v600 = vpop.permute.xlu0 %599
    %601 = vrot.lane.b32.xlu0 %v326, 88
    %v602 = vpop.permute.xlu0 %601
    %v604 = vsel %vm330, %v600, 0
    %v607 = vsel %vm330, %v602, 0
    %609 = vmatprep.subr.bf16.mxu0 0
    %610 = vmatpush1.bf16.xpose.msra.mxu0 %v607
    %611 = vmatprep.subr.bf16.mxu0 0
    %612 = vmatpush1.bf16.xpose.msra.mxu0 0
    %613 = vmatprep.subr.bf16.mxu0 0
    %614 = vmatpush1.bf16.xpose.msra.mxu0 0
    %615 = vmatprep.subr.bf16.mxu0 0
    %616 = vmatpush1.bf16.xpose.msra.mxu0 0
    %617 = vmatprep.subr.bf16.mxu0 0
    %618 = vmatpush1.bf16.xpose.msra.mxu0 0
    %619 = vmatprep.subr.bf16.mxu0 0
    %620 = vmatpush1.bf16.xpose.msra.mxu0 0
    %621 = vmatprep.subr.bf16.mxu0 0
    %622 = vmatpush1.bf16.xpose.msra.mxu0 0
    %623 = vmatprep.subr.bf16.mxu0 0
    %624 = vmatpush1.bf16.xpose.msra.mxu0 0
    %625 = vmatprep.subr.bf16.mxu0 0
    %626 = vmatpush1.bf16.xpose.msra.mxu0 0
    %627 = vmatprep.subr.bf16.mxu0 0
    %628 = vmatpush1.bf16.xpose.msra.mxu0 0
    %629 = vmatprep.subr.bf16.mxu0 0
    %630 = vmatpush1.bf16.xpose.msra.mxu0 0
    %631 = vmatprep.subr.bf16.mxu0 0
    %632 = vmatpush1.bf16.xpose.msra.mxu0 0
    %633 = vmatprep.subr.bf16.mxu0 0
    %634 = vmatpush1.bf16.xpose.msra.mxu0 0
    %635 = vmatprep.subr.bf16.mxu0 0
    %636 = vmatpush1.bf16.xpose.msra.mxu0 0
    %637 = vmatprep.subr.bf16.mxu0 0
    %638 = vmatpush1.bf16.xpose.msra.mxu0 0
    %639 = vmatprep.subr.bf16.mxu0 0
    %640 = vmatpush1.bf16.xpose.msra.mxu0 0
    %641 = vmatprep.mubr.bf16.mxu0 0
    %642 = vmatmul.mubr.bf16.gmra.mrb[0].mxu0 %v604
    %v643 = vpop.f32.mrb[0].mxu0
    %v644 = vadd.f32 0.0, %v643
    %v645 = vpop.f32.mrb[0].mxu0
    %v646 = vpop.f32.mrb[0].mxu0
    %v647 = vpop.f32.mrb[0].mxu0
    %648 = vdwg.mxu0
    %v649 = vsel %vm330, %v594, -inf
    %650 = vmax.xlane.f32.xlu0 %v649
    %v651 = vpop.xlane.xlu0 %650
    %v652 = vsel %vm330, %v644, -inf
    %653 = vmax.xlane.f32.xlu0 %v652
    %v654 = vpop.xlane.xlu0 %653
    %v655 = vsub.f32 %v594, %v651
    %v656 = vsub.f32 %v644, %v654
    %v657 = vmul.f32 %v655, 1.442695
    %v658 = vpow.pop %v657
    %v659 = vmul.f32 %v656, 1.442695
    %v660 = vpow.pop %v659
    %v661 = vsel %vm330, %v658, 0.0
    %662 = vadd.xlane.f32.xlu0 %v661
    %v663 = vpop.xlane.xlu0 %662
    %v664 = vsel %vm330, %v660, 0.0
    %665 = vadd.xlane.f32.xlu0 %v664
    %v666 = vpop.xlane.xlu0 %665
    %v667 = vrcp.pop %v663
    %v668 = vrcp.pop %v666
    %v669 = vmul.f32 %v658, %v667
    %v670 = vmul.f32 %v660, %v668
    %v671 = vpack.c.bf16 %v669, %v669
    %v672 = vpack.c.bf16 %v670, %v670
    %673 = vrot.lane.b32.xlu0 %v325, 56
    %v674 = vpop.permute.xlu0 %673
    %v676 = vsel %vm330, %v671, 0
    %v679 = vsel %vm455, %v674, 0
    %681 = vmatprep.subr.bf16.mxu0 0
    %682 = vmatpush1.bf16.msra.mxu0 %v679
    %683 = vmatprep.subr.bf16.mxu0 0
    %684 = vmatpush1.bf16.msra.mxu0 0
    %685 = vmatprep.subr.bf16.mxu0 0
    %686 = vmatpush1.bf16.msra.mxu0 0
    %687 = vmatprep.subr.bf16.mxu0 0
    %688 = vmatpush1.bf16.msra.mxu0 0
    %689 = vmatprep.subr.bf16.mxu0 0
    %690 = vmatpush1.bf16.msra.mxu0 0
    %691 = vmatprep.subr.bf16.mxu0 0
    %692 = vmatpush1.bf16.msra.mxu0 0
    %693 = vmatprep.subr.bf16.mxu0 0
    %694 = vmatpush1.bf16.msra.mxu0 0
    %695 = vmatprep.subr.bf16.mxu0 0
    %696 = vmatpush1.bf16.msra.mxu0 0
    %697 = vmatprep.subr.bf16.mxu0 0
    %698 = vmatpush1.bf16.msra.mxu0 0
    %699 = vmatprep.subr.bf16.mxu0 0
    %700 = vmatpush1.bf16.msra.mxu0 0
    %701 = vmatprep.subr.bf16.mxu0 0
    %702 = vmatpush1.bf16.msra.mxu0 0
    %703 = vmatprep.subr.bf16.mxu0 0
    %704 = vmatpush1.bf16.msra.mxu0 0
    %705 = vmatprep.subr.bf16.mxu0 0
    %706 = vmatpush1.bf16.msra.mxu0 0
    %707 = vmatprep.subr.bf16.mxu0 0
    %708 = vmatpush1.bf16.msra.mxu0 0
    %709 = vmatprep.subr.bf16.mxu0 0
    %710 = vmatpush1.bf16.msra.mxu0 0
    %711 = vmatprep.subr.bf16.mxu0 0
    %712 = vmatpush1.bf16.msra.mxu0 0
    %713 = vmatprep.mubr.bf16.mxu0 0
    %714 = vmatmul.mubr.bf16.gmra.mrb[0].mxu0 %v676
    %v715 = vpop.f32.mrb[0].mxu0
    %v716 = vadd.f32 0.0, %v715
    %v717 = vpop.f32.mrb[0].mxu0
    %v718 = vpop.f32.mrb[0].mxu0
    %v719 = vpop.f32.mrb[0].mxu0
    %720 = vdwg.mxu0
    %721 = vrot.lane.b32.xlu0 %v326, 56
    %v722 = vpop.permute.xlu0 %721
    %v724 = vsel %vm330, %v672, 0
    %v727 = vsel %vm455, %v722, 0
    %729 = vmatprep.subr.bf16.mxu0 0
    %730 = vmatpush1.bf16.msra.mxu0 %v727
    %731 = vmatprep.subr.bf16.mxu0 0
    %732 = vmatpush1.bf16.msra.mxu0 0
    %733 = vmatprep.subr.bf16.mxu0 0
    %734 = vmatpush1.bf16.msra.mxu0 0
    %735 = vmatprep.subr.bf16.mxu0 0
    %736 = vmatpush1.bf16.msra.mxu0 0
    %737 = vmatprep.subr.bf16.mxu0 0
    %738 = vmatpush1.bf16.msra.mxu0 0
    %739 = vmatprep.subr.bf16.mxu0 0
    %740 = vmatpush1.bf16.msra.mxu0 0
    %741 = vmatprep.subr.bf16.mxu0 0
    %742 = vmatpush1.bf16.msra.mxu0 0
    %743 = vmatprep.subr.bf16.mxu0 0
    %744 = vmatpush1.bf16.msra.mxu0 0
    %745 = vmatprep.subr.bf16.mxu0 0
    %746 = vmatpush1.bf16.msra.mxu0 0
    %747 = vmatprep.subr.bf16.mxu0 0
    %748 = vmatpush1.bf16.msra.mxu0 0
    %749 = vmatprep.subr.bf16.mxu0 0
    %750 = vmatpush1.bf16.msra.mxu0 0
    %751 = vmatprep.subr.bf16.mxu0 0
    %752 = vmatpush1.bf16.msra.mxu0 0
    %753 = vmatprep.subr.bf16.mxu0 0
    %754 = vmatpush1.bf16.msra.mxu0 0
    %755 = vmatprep.subr.bf16.mxu0 0
    %756 = vmatpush1.bf16.msra.mxu0 0
    %757 = vmatprep.subr.bf16.mxu0 0
    %758 = vmatpush1.bf16.msra.mxu0 0
    %759 = vmatprep.subr.bf16.mxu0 0
    %760 = vmatpush1.bf16.msra.mxu0 0
    %761 = vmatprep.mubr.bf16.mxu0 0
    %762 = vmatmul.mubr.bf16.gmra.mrb[0].mxu0 %v724
    %v763 = vpop.f32.mrb[0].mxu0
    %v764 = vadd.f32 0.0, %v763
    %v765 = vpop.f32.mrb[0].mxu0
    %v766 = vpop.f32.mrb[0].mxu0
    %v767 = vpop.f32.mrb[0].mxu0
    %768 = vdwg.mxu0
    %v769 = vpack.c.bf16 %v764, %v716
    %s770 = scalar_lea.vmem [#allocation11], 4
    %v771 = vld [vmem:[%s770] sm:$0xf]
    %v773 = vsel %vm330, %v769, 0
    %v776 = vsel %vm455, %v771, 0
    %778 = vmatprep.subr.bf16.mxu0 0
    %779 = vmatpush1.bf16.msra.mxu0 %v776
    %780 = vmatprep.subr.bf16.mxu0 0
    %781 = vmatpush1.bf16.msra.mxu0 0
    %782 = vmatprep.subr.bf16.mxu0 0
    %783 = vmatpush1.bf16.msra.mxu0 0
    %784 = vmatprep.subr.bf16.mxu0 0
    %785 = vmatpush1.bf16.msra.mxu0 0
    %786 = vmatprep.subr.bf16.mxu0 0
    %787 = vmatpush1.bf16.msra.mxu0 0
    %788 = vmatprep.subr.bf16.mxu0 0
    %789 = vmatpush1.bf16.msra.mxu0 0
    %790 = vmatprep.subr.bf16.mxu0 0
    %791 = vmatpush1.bf16.msra.mxu0 0
    %792 = vmatprep.subr.bf16.mxu0 0
    %793 = vmatpush1.bf16.msra.mxu0 0
    %794 = vmatprep.subr.bf16.mxu0 0
    %795 = vmatpush1.bf16.msra.mxu0 0
    %796 = vmatprep.subr.bf16.mxu0 0
    %797 = vmatpush1.bf16.msra.mxu0 0
    %798 = vmatprep.subr.bf16.mxu0 0
    %799 = vmatpush1.bf16.msra.mxu0 0
    %800 = vmatprep.subr.bf16.mxu0 0
    %801 = vmatpush1.bf16.msra.mxu0 0
    %802 = vmatprep.subr.bf16.mxu0 0
    %803 = vmatpush1.bf16.msra.mxu0 0
    %804 = vmatprep.subr.bf16.mxu0 0
    %805 = vmatpush1.bf16.msra.mxu0 0
    %806 = vmatprep.subr.bf16.mxu0 0
    %807 = vmatpush1.bf16.msra.mxu0 0
    %808 = vmatprep.subr.bf16.mxu0 0
    %809 = vmatpush1.bf16.msra.mxu0 0
    %810 = vmatprep.mubr.bf16.mxu0 0
    %811 = vmatmul.mubr.bf16.gmra.mrb[0].mxu0 %v773
    %v812 = vpop.f32.mrb[0].mxu0
    %v813 = vadd.f32 0.0, %v812
    %v814 = vpop.f32.mrb[0].mxu0
    %v815 = vpop.f32.mrb[0].mxu0
    %v816 = vadd.f32 0.0, %v815
    %v817 = vpop.f32.mrb[0].mxu0
    %818 = vdwg.mxu0
    %v820 = vsel %vm330, %v547, 0
    %v823 = vsel %vm455, %v548, 0
    %825 = vmatprep.subr.bf16.mxu0 0
    %826 = vmatpush1.bf16.msra.mxu0 %v823
    %827 = vmatprep.subr.bf16.mxu0 0
    %828 = vmatpush1.bf16.msra.mxu0 0
    %829 = vmatprep.subr.bf16.mxu0 0
    %830 = vmatpush1.bf16.msra.mxu0 0
    %831 = vmatprep.subr.bf16.mxu0 0
    %832 = vmatpush1.bf16.msra.mxu0 0
    %833 = vmatprep.subr.bf16.mxu0 0
    %834 = vmatpush1.bf16.msra.mxu0 0
    %835 = vmatprep.subr.bf16.mxu0 0
    %836 = vmatpush1.bf16.msra.mxu0 0
    %837 = vmatprep.subr.bf16.mxu0 0
    %838 = vmatpush1.bf16.msra.mxu0 0
    %839 = vmatprep.subr.bf16.mxu0 0
    %840 = vmatpush1.bf16.msra.mxu0 0
    %841 = vmatprep.subr.bf16.mxu0 0
    %842 = vmatpush1.bf16.msra.mxu0 0
    %843 = vmatprep.subr.bf16.mxu0 0
    %844 = vmatpush1.bf16.msra.mxu0 0
    %845 = vmatprep.subr.bf16.mxu0 0
    %846 = vmatpush1.bf16.msra.mxu0 0
    %847 = vmatprep.subr.bf16.mxu0 0
    %848 = vmatpush1.bf16.msra.mxu0 0
    %849 = vmatprep.subr.bf16.mxu0 0
    %850 = vmatpush1.bf16.msra.mxu0 0
    %851 = vmatprep.subr.bf16.mxu0 0
    %852 = vmatpush1.bf16.msra.mxu0 0
    %853 = vmatprep.subr.bf16.mxu0 0
    %854 = vmatpush1.bf16.msra.mxu0 0
    %855 = vmatprep.subr.bf16.mxu0 0
    %856 = vmatpush1.bf16.msra.mxu0 0
    %857 = vmatprep.mubr.bf16.mxu0 0
    %858 = vmatmul.mubr.bf16.gmra.mrb[0].mxu0 %v820
    %v859 = vpop.f32.mrb[0].mxu0
    %v860 = vadd.f32 %v813, %v859
    %v861 = vpop.f32.mrb[0].mxu0
    %v862 = vpop.f32.mrb[0].mxu0
    %v863 = vadd.f32 %v816, %v862
    %v864 = vpop.f32.mrb[0].mxu0
    %865 = vdwg.mxu0
    %866 = vrot.lane.b32.xlu0 %v325, 112
    %v867 = vpop.permute.xlu0 %866
    %868 = vrot.lane.b32.xlu0 %v325, 80
    %v869 = vpop.permute.xlu0 %868
    %v871 = vsel %vm330, %v867, 0
    %v874 = vsel %vm330, %v869, 0
    %876 = vmatprep.subr.bf16.mxu0 0
    %877 = vmatpush1.bf16.xpose.msra.mxu0 %v874
    %878 = vmatprep.subr.bf16.mxu0 0
    %879 = vmatpush1.bf16.xpose.msra.mxu0 0
    %880 = vmatprep.subr.bf16.mxu0 0
    %881 = vmatpush1.bf16.xpose.msra.mxu0 0
    %882 = vmatprep.subr.bf16.mxu0 0
    %883 = vmatpush1.bf16.xpose.msra.mxu0 0
    %884 = vmatprep.subr.bf16.mxu0 0
    %885 = vmatpush1.bf16.xpose.msra.mxu0 0
    %886 = vmatprep.subr.bf16.mxu0 0
    %887 = vmatpush1.bf16.xpose.msra.mxu0 0
    %888 = vmatprep.subr.bf16.mxu0 0
    %889 = vmatpush1.bf16.xpose.msra.mxu0 0
    %890 = vmatprep.subr.bf16.mxu0 0
    %891 = vmatpush1.bf16.xpose.msra.mxu0 0
    %892 = vmatprep.subr.bf16.mxu0 0
    %893 = vmatpush1.bf16.xpose.msra.mxu0 0
    %894 = vmatprep.subr.bf16.mxu0 0
    %895 = vmatpush1.bf16.xpose.msra.mxu0 0
    %896 = vmatprep.subr.bf16.mxu0 0
    %897 = vmatpush1.bf16.xpose.msra.mxu0 0
    %898 = vmatprep.subr.bf16.mxu0 0
    %899 = vmatpush1.bf16.xpose.msra.mxu0 0
    %900 = vmatprep.subr.bf16.mxu0 0
    %901 = vmatpush1.bf16.xpose.msra.mxu0 0
    %902 = vmatprep.subr.bf16.mxu0 0
    %903 = vmatpush1.bf16.xpose.msra.mxu0 0
    %904 = vmatprep.subr.bf16.mxu0 0
    %905 = vmatpush1.bf16.xpose.msra.mxu0 0
    %906 = vmatprep.subr.bf16.mxu0 0
    %907 = vmatpush1.bf16.xpose.msra.mxu0 0
    %908 = vmatprep.mubr.bf16.mxu0 0
    %909 = vmatmul.mubr.bf16.gmra.mrb[0].mxu0 %v871
    %v910 = vpop.f32.mrb[0].mxu0
    %v911 = vadd.f32 0.0, %v910
    %v912 = vpop.f32.mrb[0].mxu0
    %v913 = vpop.f32.mrb[0].mxu0
    %v914 = vpop.f32.mrb[0].mxu0
    %915 = vdwg.mxu0
    %916 = vrot.lane.b32.xlu0 %v326, 112
    %v917 = vpop.permute.xlu0 %916
    %918 = vrot.lane.b32.xlu0 %v326, 80
    %v919 = vpop.permute.xlu0 %918
    %v921 = vsel %vm330, %v917, 0
    %v924 = vsel %vm330, %v919, 0
    %926 = vmatprep.subr.bf16.mxu0 0
    %927 = vmatpush1.bf16.xpose.msra.mxu0 %v924
    %928 = vmatprep.subr.bf16.mxu0 0
    %929 = vmatpush1.bf16.xpose.msra.mxu0 0
    %930 = vmatprep.subr.bf16.mxu0 0
    %931 = vmatpush1.bf16.xpose.msra.mxu0 0
    %932 = vmatprep.subr.bf16.mxu0 0
    %933 = vmatpush1.bf16.xpose.msra.mxu0 0
    %934 = vmatprep.subr.bf16.mxu0 0
    %935 = vmatpush1.bf16.xpose.msra.mxu0 0
    %936 = vmatprep.subr.bf16.mxu0 0
    %937 = vmatpush1.bf16.xpose.msra.mxu0 0
    %938 = vmatprep.subr.bf16.mxu0 0
    %939 = vmatpush1.bf16.xpose.msra.mxu0 0
    %940 = vmatprep.subr.bf16.mxu0 0
    %941 = vmatpush1.bf16.xpose.msra.mxu0 0
    %942 = vmatprep.subr.bf16.mxu0 0
    %943 = vmatpush1.bf16.xpose.msra.mxu0 0
    %944 = vmatprep.subr.bf16.mxu0 0
    %945 = vmatpush1.bf16.xpose.msra.mxu0 0
    %946 = vmatprep.subr.bf16.mxu0 0
    %947 = vmatpush1.bf16.xpose.msra.mxu0 0
    %948 = vmatprep.subr.bf16.mxu0 0
    %949 = vmatpush1.bf16.xpose.msra.mxu0 0
    %950 = vmatprep.subr.bf16.mxu0 0
    %951 = vmatpush1.bf16.xpose.msra.mxu0 0
    %952 = vmatprep.subr.bf16.mxu0 0
    %953 = vmatpush1.bf16.xpose.msra.mxu0 0
    %954 = vmatprep.subr.bf16.mxu0 0
    %955 = vmatpush1.bf16.xpose.msra.mxu0 0
    %956 = vmatprep.subr.bf16.mxu0 0
    %957 = vmatpush1.bf16.xpose.msra.mxu0 0
    %958 = vmatprep.mubr.bf16.mxu0 0
    %959 = vmatmul.mubr.bf16.gmra.mrb[0].mxu0 %v921
    %v960 = vpop.f32.mrb[0].mxu0
    %v961 = vadd.f32 0.0, %v960
    %v962 = vpop.f32.mrb[0].mxu0
    %v963 = vpop.f32.mrb[0].mxu0
    %v964 = vpop.f32.mrb[0].mxu0
    %965 = vdwg.mxu0
    %v966 = vsel %vm330, %v911, -inf
    %967 = vmax.xlane.f32.xlu0 %v966
    %v968 = vpop.xlane.xlu0 %967
    %v969 = vsel %vm330, %v961, -inf
    %970 = vmax.xlane.f32.xlu0 %v969
    %v971 = vpop.xlane.xlu0 %970
    %v972 = vsub.f32 %v911, %v968
    %v973 = vsub.f32 %v961, %v971
    %v974 = vmul.f32 %v972, 1.442695
    %v975 = vpow.pop %v974
    %v976 = vmul.f32 %v973, 1.442695
    %v977 = vpow.pop %v976
    %v978 = vsel %vm330, %v975, 0.0
    %979 = vadd.xlane.f32.xlu0 %v978
    %v980 = vpop.xlane.xlu0 %979
    %v981 = vsel %vm330, %v977, 0.0
    %982 = vadd.xlane.f32.xlu0 %v981
    %v983 = vpop.xlane.xlu0 %982
    %v984 = vrcp.pop %v980
    %v985 = vrcp.pop %v983
    %v986 = vmul.f32 %v975, %v984
    %v987 = vmul.f32 %v977, %v985
    %v988 = vpack.c.bf16 %v986, %v986
    %v989 = vpack.c.bf16 %v987, %v987
    %990 = vrot.lane.b32.xlu0 %v325, 48
    %v991 = vpop.permute.xlu0 %990
    %v993 = vsel %vm330, %v988, 0
    %v996 = vsel %vm455, %v991, 0
    %998 = vmatprep.subr.bf16.mxu0 0
    %999 = vmatpush1.bf16.msra.mxu0 %v996
    %1000 = vmatprep.subr.bf16.mxu0 0
    %1001 = vmatpush1.bf16.msra.mxu0 0
    %1002 = vmatprep.subr.bf16.mxu0 0
    %1003 = vmatpush1.bf16.msra.mxu0 0
    %1004 = vmatprep.subr.bf16.mxu0 0
    %1005 = vmatpush1.bf16.msra.mxu0 0
    %1006 = vmatprep.subr.bf16.mxu0 0
    %1007 = vmatpush1.bf16.msra.mxu0 0
    %1008 = vmatprep.subr.bf16.mxu0 0
    %1009 = vmatpush1.bf16.msra.mxu0 0
    %1010 = vmatprep.subr.bf16.mxu0 0
    %1011 = vmatpush1.bf16.msra.mxu0 0
    %1012 = vmatprep.subr.bf16.mxu0 0
    %1013 = vmatpush1.bf16.msra.mxu0 0
    %1014 = vmatprep.subr.bf16.mxu0 0
    %1015 = vmatpush1.bf16.msra.mxu0 0
    %1016 = vmatprep.subr.bf16.mxu0 0
    %1017 = vmatpush1.bf16.msra.mxu0 0
    %1018 = vmatprep.subr.bf16.mxu0 0
    %1019 = vmatpush1.bf16.msra.mxu0 0
    %1020 = vmatprep.subr.bf16.mxu0 0
    %1021 = vmatpush1.bf16.msra.mxu0 0
    %1022 = vmatprep.subr.bf16.mxu0 0
    %1023 = vmatpush1.bf16.msra.mxu0 0
    %1024 = vmatprep.subr.bf16.mxu0 0
    %1025 = vmatpush1.bf16.msra.mxu0 0
    %1026 = vmatprep.subr.bf16.mxu0 0
    %1027 = vmatpush1.bf16.msra.mxu0 0
    %1028 = vmatprep.subr.bf16.mxu0 0
    %1029 = vmatpush1.bf16.msra.mxu0 0
    %1030 = vmatprep.mubr.bf16.mxu0 0
    %1031 = vmatmul.mubr.bf16.gmra.mrb[0].mxu0 %v993
    %v1032 = vpop.f32.mrb[0].mxu0
    %v1033 = vadd.f32 0.0, %v1032
    %v1034 = vpop.f32.mrb[0].mxu0
    %v1035 = vpop.f32.mrb[0].mxu0
    %v1036 = vpop.f32.mrb[0].mxu0
    %1037 = vdwg.mxu0
    %1038 = vrot.lane.b32.xlu0 %v326, 48
    %v1039 = vpop.permute.xlu0 %1038
    %v1041 = vsel %vm330, %v989, 0
    %v1044 = vsel %vm455, %v1039, 0
    %1046 = vmatprep.subr.bf16.mxu0 0
    %1047 = vmatpush1.bf16.msra.mxu0 %v1044
    %1048 = vmatprep.subr.bf16.mxu0 0
    %1049 = vmatpush1.bf16.msra.mxu0 0
    %1050 = vmatprep.subr.bf16.mxu0 0
    %1051 = vmatpush1.bf16.msra.mxu0 0
    %1052 = vmatprep.subr.bf16.mxu0 0
    %1053 = vmatpush1.bf16.msra.mxu0 0
    %1054 = vmatprep.subr.bf16.mxu0 0
    %1055 = vmatpush1.bf16.msra.mxu0 0
    %1056 = vmatprep.subr.bf16.mxu0 0
    %1057 = vmatpush1.bf16.msra.mxu0 0
    %1058 = vmatprep.subr.bf16.mxu0 0
    %1059 = vmatpush1.bf16.msra.mxu0 0
    %1060 = vmatprep.subr.bf16.mxu0 0
    %1061 = vmatpush1.bf16.msra.mxu0 0
    %1062 = vmatprep.subr.bf16.mxu0 0
    %1063 = vmatpush1.bf16.msra.mxu0 0
    %1064 = vmatprep.subr.bf16.mxu0 0
    %1065 = vmatpush1.bf16.msra.mxu0 0
    %1066 = vmatprep.subr.bf16.mxu0 0
    %1067 = vmatpush1.bf16.msra.mxu0 0
    %1068 = vmatprep.subr.bf16.mxu0 0
    %1069 = vmatpush1.bf16.msra.mxu0 0
    %1070 = vmatprep.subr.bf16.mxu0 0
    %1071 = vmatpush1.bf16.msra.mxu0 0
    %1072 = vmatprep.subr.bf16.mxu0 0
    %1073 = vmatpush1.bf16.msra.mxu0 0
    %1074 = vmatprep.subr.bf16.mxu0 0
    %1075 = vmatpush1.bf16.msra.mxu0 0
    %1076 = vmatprep.subr.bf16.mxu0 0
    %1077 = vmatpush1.bf16.msra.mxu0 0
    %1078 = vmatprep.mubr.bf16.mxu0 0
    %1079 = vmatmul.mubr.bf16.gmra.mrb[0].mxu0 %v1041
    %v1080 = vpop.f32.mrb[0].mxu0
    %v1081 = vadd.f32 0.0, %v1080
    %v1082 = vpop.f32.mrb[0].mxu0
    %v1083 = vpop.f32.mrb[0].mxu0
    %v1084 = vpop.f32.mrb[0].mxu0
    %1085 = vdwg.mxu0
    %v1086 = vpack.c.bf16 %v1081, %v1033
    %s1087 = scalar_lea.vmem [#allocation11], 8
    %v1088 = vld [vmem:[%s1087] sm:$0xf]
    %v1090 = vsel %vm330, %v1086, 0
    %v1093 = vsel %vm455, %v1088, 0
    %1095 = vmatprep.subr.bf16.mxu0 0
    %1096 = vmatpush1.bf16.msra.mxu0 %v1093
    %1097 = vmatprep.subr.bf16.mxu0 0
    %1098 = vmatpush1.bf16.msra.mxu0 0
    %1099 = vmatprep.subr.bf16.mxu0 0
    %1100 = vmatpush1.bf16.msra.mxu0 0
    %1101 = vmatprep.subr.bf16.mxu0 0
    %1102 = vmatpush1.bf16.msra.mxu0 0
    %1103 = vmatprep.subr.bf16.mxu0 0
    %1104 = vmatpush1.bf16.msra.mxu0 0
    %1105 = vmatprep.subr.bf16.mxu0 0
    %1106 = vmatpush1.bf16.msra.mxu0 0
    %1107 = vmatprep.subr.bf16.mxu0 0
    %1108 = vmatpush1.bf16.msra.mxu0 0
    %1109 = vmatprep.subr.bf16.mxu0 0
    %1110 = vmatpush1.bf16.msra.mxu0 0
    %1111 = vmatprep.subr.bf16.mxu0 0
    %1112 = vmatpush1.bf16.msra.mxu0 0
    %1113 = vmatprep.subr.bf16.mxu0 0
    %1114 = vmatpush1.bf16.msra.mxu0 0
    %1115 = vmatprep.subr.bf16.mxu0 0
    %1116 = vmatpush1.bf16.msra.mxu0 0
    %1117 = vmatprep.subr.bf16.mxu0 0
    %1118 = vmatpush1.bf16.msra.mxu0 0
    %1119 = vmatprep.subr.bf16.mxu0 0
    %1120 = vmatpush1.bf16.msra.mxu0 0
    %1121 = vmatprep.subr.bf16.mxu0 0
    %1122 = vmatpush1.bf16.msra.mxu0 0
    %1123 = vmatprep.subr.bf16.mxu0 0
    %1124 = vmatpush1.bf16.msra.mxu0 0
    %1125 = vmatprep.subr.bf16.mxu0 0
    %1126 = vmatpush1.bf16.msra.mxu0 0
    %1127 = vmatprep.mubr.bf16.mxu0 0
    %1128 = vmatmul.mubr.bf16.gmra.mrb[0].mxu0 %v1090
    %v1129 = vpop.f32.mrb[0].mxu0
    %v1130 = vadd.f32 0.0, %v1129
    %v1131 = vpop.f32.mrb[0].mxu0
    %v1132 = vpop.f32.mrb[0].mxu0
    %v1133 = vadd.f32 0.0, %v1132
    %v1134 = vpop.f32.mrb[0].mxu0
    %1135 = vdwg.mxu0
    %v1136 = vadd.f32 %v860, %v1130
    %v1137 = vadd.f32 %v863, %v1133
    %1138 = vrot.lane.b32.xlu0 %v325, 104
    %v1139 = vpop.permute.xlu0 %1138
    %1140 = vrot.lane.b32.xlu0 %v325, 72
    %v1141 = vpop.permute.xlu0 %1140
    %v1143 = vsel %vm330, %v1139, 0
    %v1146 = vsel %vm330, %v1141, 0
    %1148 = vmatprep.subr.bf16.mxu0 0
    %1149 = vmatpush1.bf16.xpose.msra.mxu0 %v1146
    %1150 = vmatprep.subr.bf16.mxu0 0
    %1151 = vmatpush1.bf16.xpose.msra.mxu0 0
    %1152 = vmatprep.subr.bf16.mxu0 0
    %1153 = vmatpush1.bf16.xpose.msra.mxu0 0
    %1154 = vmatprep.subr.bf16.mxu0 0
    %1155 = vmatpush1.bf16.xpose.msra.mxu0 0
    %1156 = vmatprep.subr.bf16.mxu0 0
    %1157 = vmatpush1.bf16.xpose.msra.mxu0 0
    %1158 = vmatprep.subr.bf16.mxu0 0
    %1159 = vmatpush1.bf16.xpose.msra.mxu0 0
    %1160 = vmatprep.subr.bf16.mxu0 0
    %1161 = vmatpush1.bf16.xpose.msra.mxu0 0
    %1162 = vmatprep.subr.bf16.mxu0 0
    %1163 = vmatpush1.bf16.xpose.msra.mxu0 0
    %1164 = vmatprep.subr.bf16.mxu0 0
    %1165 = vmatpush1.bf16.xpose.msra.mxu0 0
    %1166 = vmatprep.subr.bf16.mxu0 0
    %1167 = vmatpush1.bf16.xpose.msra.mxu0 0
    %1168 = vmatprep.subr.bf16.mxu0 0
    %1169 = vmatpush1.bf16.xpose.msra.mxu0 0
    %1170 = vmatprep.subr.bf16.mxu0 0
    %1171 = vmatpush1.bf16.xpose.msra.mxu0 0
    %1172 = vmatprep.subr.bf16.mxu0 0
    %1173 = vmatpush1.bf16.xpose.msra.mxu0 0
    %1174 = vmatprep.subr.bf16.mxu0 0
    %1175 = vmatpush1.bf16.xpose.msra.mxu0 0
    %1176 = vmatprep.subr.bf16.mxu0 0
    %1177 = vmatpush1.bf16.xpose.msra.mxu0 0
    %1178 = vmatprep.subr.bf16.mxu0 0
    %1179 = vmatpush1.bf16.xpose.msra.mxu0 0
    %1180 = vmatprep.mubr.bf16.mxu0 0
    %1181 = vmatmul.mubr.bf16.gmra.mrb[0].mxu0 %v1143
    %v1182 = vpop.f32.mrb[0].mxu0
    %v1183 = vadd.f32 0.0, %v1182
    %v1184 = vpop.f32.mrb[0].mxu0
    %v1185 = vpop.f32.mrb[0].mxu0
    %v1186 = vpop.f32.mrb[0].mxu0
    %1187 = vdwg.mxu0
    %1188 = vrot.lane.b32.xlu0 %v326, 104
    %v1189 = vpop.permute.xlu0 %1188
    %1190 = vrot.lane.b32.xlu0 %v326, 72
    %v1191 = vpop.permute.xlu0 %1190
    %v1193 = vsel %vm330, %v1189, 0
    %v1196 = vsel %vm330, %v1191, 0
    %1198 = vmatprep.subr.bf16.mxu0 0
    %1199 = vmatpush1.bf16.xpose.msra.mxu0 %v1196
    %1200 = vmatprep.subr.bf16.mxu0 0
    %1201 = vmatpush1.bf16.xpose.msra.mxu0 0
    %1202 = vmatprep.subr.bf16.mxu0 0
    %1203 = vmatpush1.bf16.xpose.msra.mxu0 0
    %1204 = vmatprep.subr.bf16.mxu0 0
    %1205 = vmatpush1.bf16.xpose.msra.mxu0 0
    %1206 = vmatprep.subr.bf16.mxu0 0
    %1207 = vmatpush1.bf16.xpose.msra.mxu0 0
    %1208 = vmatprep.subr.bf16.mxu0 0
    %1209 = vmatpush1.bf16.xpose.msra.mxu0 0
    %1210 = vmatprep.subr.bf16.mxu0 0
    %1211 = vmatpush1.bf16.xpose.msra.mxu0 0
    %1212 = vmatprep.subr.bf16.mxu0 0
    %1213 = vmatpush1.bf16.xpose.msra.mxu0 0
    %1214 = vmatprep.subr.bf16.mxu0 0
    %1215 = vmatpush1.bf16.xpose.msra.mxu0 0
    %1216 = vmatprep.subr.bf16.mxu0 0
    %1217 = vmatpush1.bf16.xpose.msra.mxu0 0
    %1218 = vmatprep.subr.bf16.mxu0 0
    %1219 = vmatpush1.bf16.xpose.msra.mxu0 0
    %1220 = vmatprep.subr.bf16.mxu0 0
    %1221 = vmatpush1.bf16.xpose.msra.mxu0 0
    %1222 = vmatprep.subr.bf16.mxu0 0
    %1223 = vmatpush1.bf16.xpose.msra.mxu0 0
    %1224 = vmatprep.subr.bf16.mxu0 0
    %1225 = vmatpush1.bf16.xpose.msra.mxu0 0
    %1226 = vmatprep.subr.bf16.mxu0 0
    %1227 = vmatpush1.bf16.xpose.msra.mxu0 0
    %1228 = vmatprep.subr.bf16.mxu0 0
    %1229 = vmatpush1.bf16.xpose.msra.mxu0 0
    %1230 = vmatprep.mubr.bf16.mxu0 0
    %1231 = vmatmul.mubr.bf16.gmra.mrb[0].mxu0 %v1193
    %v1232 = vpop.f32.mrb[0].mxu0
    %v1233 = vadd.f32 0.0, %v1232
    %v1234 = vpop.f32.mrb[0].mxu0
    %v1235 = vpop.f32.mrb[0].mxu0
    %v1236 = vpop.f32.mrb[0].mxu0
    %1237 = vdwg.mxu0
    %v1238 = vsel %vm330, %v1183, -inf
    %1239 = vmax.xlane.f32.xlu0 %v1238
    %v1240 = vpop.xlane.xlu0 %1239
    %v1241 = vsel %vm330, %v1233, -inf
    %1242 = vmax.xlane.f32.xlu0 %v1241
    %v1243 = vpop.xlane.xlu0 %1242
    %v1244 = vsub.f32 %v1183, %v1240
    %v1245 = vsub.f32 %v1233, %v1243
    %v1246 = vmul.f32 %v1244, 1.442695
    %v1247 = vpow.pop %v1246
    %v1248 = vmul.f32 %v1245, 1.442695
    %v1249 = vpow.pop %v1248
    %v1250 = vsel %vm330, %v1247, 0.0
    %1251 = vadd.xlane.f32.xlu0 %v1250
    %v1252 = vpop.xlane.xlu0 %1251
    %v1253 = vsel %vm330, %v1249, 0.0
    %1254 = vadd.xlane.f32.xlu0 %v1253
    %v1255 = vpop.xlane.xlu0 %1254
    %v1256 = vrcp.pop %v1252
    %v1257 = vrcp.pop %v1255
    %v1258 = vmul.f32 %v1247, %v1256
    %v1259 = vmul.f32 %v1249, %v1257
    %v1260 = vpack.c.bf16 %v1258, %v1258
    %v1261 = vpack.c.bf16 %v1259, %v1259
    %1262 = vrot.lane.b32.xlu0 %v325, 40
    %v1263 = vpop.permute.xlu0 %1262
    %v1265 = vsel %vm330, %v1260, 0
    %v1268 = vsel %vm455, %v1263, 0
    %1270 = vmatprep.subr.bf16.mxu0 0
    %1271 = vmatpush1.bf16.msra.mxu0 %v1268
    %1272 = vmatprep.subr.bf16.mxu0 0
    %1273 = vmatpush1.bf16.msra.mxu0 0
    %1274 = vmatprep.subr.bf16.mxu0 0
    %1275 = vmatpush1.bf16.msra.mxu0 0
    %1276 = vmatprep.subr.bf16.mxu0 0
    %1277 = vmatpush1.bf16.msra.mxu0 0
    %1278 = vmatprep.subr.bf16.mxu0 0
    %1279 = vmatpush1.bf16.msra.mxu0 0
    %1280 = vmatprep.subr.bf16.mxu0 0
    %1281 = vmatpush1.bf16.msra.mxu0 0
    %1282 = vmatprep.subr.bf16.mxu0 0
    %1283 = vmatpush1.bf16.msra.mxu0 0
    %1284 = vmatprep.subr.bf16.mxu0 0
    %1285 = vmatpush1.bf16.msra.mxu0 0
    %1286 = vmatprep.subr.bf16.mxu0 0
    %1287 = vmatpush1.bf16.msra.mxu0 0
    %1288 = vmatprep.subr.bf16.mxu0 0
    %1289 = vmatpush1.bf16.msra.mxu0 0
    %1290 = vmatprep.subr.bf16.mxu0 0
    %1291 = vmatpush1.bf16.msra.mxu0 0
    %1292 = vmatprep.subr.bf16.mxu0 0
    %1293 = vmatpush1.bf16.msra.mxu0 0
    %1294 = vmatprep.subr.bf16.mxu0 0
    %1295 = vmatpush1.bf16.msra.mxu0 0
    %1296 = vmatprep.subr.bf16.mxu0 0
    %1297 = vmatpush1.bf16.msra.mxu0 0
    %1298 = vmatprep.subr.bf16.mxu0 0
    %1299 = vmatpush1.bf16.msra.mxu0 0
    %1300 = vmatprep.subr.bf16.mxu0 0
    %1301 = vmatpush1.bf16.msra.mxu0 0
    %1302 = vmatprep.mubr.bf16.mxu0 0
    %1303 = vmatmul.mubr.bf16.gmra.mrb[0].mxu0 %v1265
    %v1304 = vpop.f32.mrb[0].mxu0
    %v1305 = vadd.f32 0.0, %v1304
    %v1306 = vpop.f32.mrb[0].mxu0
    %v1307 = vpop.f32.mrb[0].mxu0
    %v1308 = vpop.f32.mrb[0].mxu0
    %1309 = vdwg.mxu0
    %1310 = vrot.lane.b32.xlu0 %v326, 40
    %v1311 = vpop.permute.xlu0 %1310
    %v1313 = vsel %vm330, %v1261, 0
    %v1316 = vsel %vm455, %v1311, 0
    %1318 = vmatprep.subr.bf16.mxu0 0
    %1319 = vmatpush1.bf16.msra.mxu0 %v1316
    %1320 = vmatprep.subr.bf16.mxu0 0
    %1321 = vmatpush1.bf16.msra.mxu0 0
    %1322 = vmatprep.subr.bf16.mxu0 0
    %1323 = vmatpush1.bf16.msra.mxu0 0
    %1324 = vmatprep.subr.bf16.mxu0 0
    %1325 = vmatpush1.bf16.msra.mxu0 0
    %1326 = vmatprep.subr.bf16.mxu0 0
    %1327 = vmatpush1.bf16.msra.mxu0 0
    %1328 = vmatprep.subr.bf16.mxu0 0
    %1329 = vmatpush1.bf16.msra.mxu0 0
    %1330 = vmatprep.subr.bf16.mxu0 0
    %1331 = vmatpush1.bf16.msra.mxu0 0
    %1332 = vmatprep.subr.bf16.mxu0 0
    %1333 = vmatpush1.bf16.msra.mxu0 0
    %1334 = vmatprep.subr.bf16.mxu0 0
    %1335 = vmatpush1.bf16.msra.mxu0 0
    %1336 = vmatprep.subr.bf16.mxu0 0
    %1337 = vmatpush1.bf16.msra.mxu0 0
    %1338 = vmatprep.subr.bf16.mxu0 0
    %1339 = vmatpush1.bf16.msra.mxu0 0
    %1340 = vmatprep.subr.bf16.mxu0 0
    %1341 = vmatpush1.bf16.msra.mxu0 0
    %1342 = vmatprep.subr.bf16.mxu0 0
    %1343 = vmatpush1.bf16.msra.mxu0 0
    %1344 = vmatprep.subr.bf16.mxu0 0
    %1345 = vmatpush1.bf16.msra.mxu0 0
    %1346 = vmatprep.subr.bf16.mxu0 0
    %1347 = vmatpush1.bf16.msra.mxu0 0
    %1348 = vmatprep.subr.bf16.mxu0 0
    %1349 = vmatpush1.bf16.msra.mxu0 0
    %1350 = vmatprep.mubr.bf16.mxu0 0
    %1351 = vmatmul.mubr.bf16.gmra.mrb[0].mxu0 %v1313
    %v1352 = vpop.f32.mrb[0].mxu0
    %v1353 = vadd.f32 0.0, %v1352
    %v1354 = vpop.f32.mrb[0].mxu0
    %v1355 = vpop.f32.mrb[0].mxu0
    %v1356 = vpop.f32.mrb[0].mxu0
    %1357 = vdwg.mxu0
    %v1358 = vpack.c.bf16 %v1353, %v1305
    %s1359 = scalar_lea.vmem [#allocation11], 12
    %v1360 = vld [vmem:[%s1359] sm:$0xf]
    %v1362 = vsel %vm330, %v1358, 0
    %v1365 = vsel %vm455, %v1360, 0
    %1367 = vmatprep.subr.bf16.mxu0 0
    %1368 = vmatpush1.bf16.msra.mxu0 %v1365
    %1369 = vmatprep.subr.bf16.mxu0 0
    %1370 = vmatpush1.bf16.msra.mxu0 0
    %1371 = vmatprep.subr.bf16.mxu0 0
    %1372 = vmatpush1.bf16.msra.mxu0 0
    %1373 = vmatprep.subr.bf16.mxu0 0
    %1374 = vmatpush1.bf16.msra.mxu0 0
    %1375 = vmatprep.subr.bf16.mxu0 0
    %1376 = vmatpush1.bf16.msra.mxu0 0
    %1377 = vmatprep.subr.bf16.mxu0 0
    %1378 = vmatpush1.bf16.msra.mxu0 0
    %1379 = vmatprep.subr.bf16.mxu0 0
    %1380 = vmatpush1.bf16.msra.mxu0 0
    %1381 = vmatprep.subr.bf16.mxu0 0
    %1382 = vmatpush1.bf16.msra.mxu0 0
    %1383 = vmatprep.subr.bf16.mxu0 0
    %1384 = vmatpush1.bf16.msra.mxu0 0
    %1385 = vmatprep.subr.bf16.mxu0 0
    %1386 = vmatpush1.bf16.msra.mxu0 0
    %1387 = vmatprep.subr.bf16.mxu0 0
    %1388 = vmatpush1.bf16.msra.mxu0 0
    %1389 = vmatprep.subr.bf16.mxu0 0
    %1390 = vmatpush1.bf16.msra.mxu0 0
    %1391 = vmatprep.subr.bf16.mxu0 0
    %1392 = vmatpush1.bf16.msra.mxu0 0
    %1393 = vmatprep.subr.bf16.mxu0 0
    %1394 = vmatpush1.bf16.msra.mxu0 0
    %1395 = vmatprep.subr.bf16.mxu0 0
    %1396 = vmatpush1.bf16.msra.mxu0 0
    %1397 = vmatprep.subr.bf16.mxu0 0
    %1398 = vmatpush1.bf16.msra.mxu0 0
    %1399 = vmatprep.mubr.bf16.mxu0 0
    %1400 = vmatmul.mubr.bf16.gmra.mrb[0].mxu0 %v1362
    %v1401 = vpop.f32.mrb[0].mxu0
    %v1402 = vadd.f32 0.0, %v1401
    %v1403 = vpop.f32.mrb[0].mxu0
    %v1404 = vpop.f32.mrb[0].mxu0
    %v1405 = vadd.f32 0.0, %v1404
    %v1406 = vpop.f32.mrb[0].mxu0
    %1407 = vdwg.mxu0
    %v1408 = vadd.f32 %v1136, %v1402
    %v1409 = vadd.f32 %v1137, %v1405
    %v1410 = vld [vmem:[#allocation13] sm:$0x1]
    %v1412 = vlaneseq
    %v1413 = vshrl.u32 %v1412, 7
    %v1414 = vsub.s32 0, %v1413
    %v1415 = vrot.slane %v1410, %v1414
    %v1417 = vadd.f32 %v1408, %v1415
    %v1418 = vadd.f32 %v1409, %v1415
    %v1419 = vadd.f32 %v210, %v1417
    %v1420 = vadd.f32 %v211, %v1418
    %v1421 = vsel %vm165, %v1419, 0.0
    %1422 = vadd.xlane.f32.xlu0 %v1421
    %v1423 = vpop.xlane.xlu0 %1422
    %v1424 = vsel %vm165, %v1420, 0.0
    %1425 = vadd.xlane.f32.xlu0 %v1424
    %v1426 = vpop.xlane.xlu0 %1425
    %v1427 = vmul.f32 %v1423, %v220
    %v1428 = vmul.f32 %v1426, %v220
    %v1429 = vsub.f32 %v1419, %v1427
    %v1430 = vsub.f32 %v1420, %v1428
    %v1431 = vmul.f32 %v1429, %v1429
    %v1432 = vmul.f32 %v1430, %v1430
    %v1433 = vsel %vm165, %v1431, 0.0
    %1434 = vadd.xlane.f32.xlu0 %v1433
    %v1435 = vpop.xlane.xlu0 %1434
    %v1436 = vsel %vm165, %v1432, 0.0
    %1437 = vadd.xlane.f32.xlu0 %v1436
    %v1438 = vpop.xlane.xlu0 %1437
    %v1439 = vmul.f32 %v1435, %v220
    %v1440 = vmul.f32 %v1438, %v220
    %v1441 = vadd.f32 %v1439, 1e-05
    %v1442 = vadd.f32 %v1440, 1e-05
    %v1443 = vrsqrt.pop %v1441
    %v1444 = vrsqrt.pop %v1442
    %v1445 = vmul.f32 %v1429, %v1443
    %v1446 = vmul.f32 %v1430, %v1444
    %v1447 = vmul.f32 %v1445, %v245
    %v1448 = vmul.f32 %v1446, %v245
    %v1449 = vadd.f32 %v1447, %v253
    %v1450 = vadd.f32 %v1448, %v253
    %v1451 = vpack.c.bf16 %v1450, %v1449
    %v1452 = vld [vmem:[%s10] sm:$0xf]
    %v1453 = vld [vmem:[%s10 + $0x4] sm:$0xf]
    %v1454 = vld [vmem:[%s10 + $0x8] sm:$0xf]
    %v1455 = vld [vmem:[%s10 + $0xc] sm:$0xf]
    %v1456 = vld [vmem:[%s11] sm:$0x1]
    %v1458 = vlaneseq
    %v1459 = vshrl.u32 %v1458, 7
    %v1460 = vsub.s32 0, %v1459
    %v1461 = vrot.slane %v1456, %v1460
    %v1467 = vunpack.c.l.b16 %v1452
    %v1468 = vunpack.c.l.b16 %v1453
    %v1469 = vunpack.c.l.b16 %v1454
    %v1470 = vunpack.c.l.b16 %v1455
    %v1471 = vpack.c.b16 %v1468, %v1467
    %v1472 = vpack.c.b16 %v1470, %v1469
    %v1476 = vsel %vm165, %v1451, 0
    %1478 = vmatprep.subr.bf16.mxu0 0
    %1479 = vmatpush1.bf16.msra.mxu0 %v1471
    %1480 = vmatprep.subr.bf16.mxu0 0
    %1481 = vmatpush1.bf16.msra.mxu0 %v1472
    %1482 = vmatprep.subr.bf16.mxu0 0
    %1483 = vmatpush1.bf16.msra.mxu0 0
    %1484 = vmatprep.subr.bf16.mxu0 0
    %1485 = vmatpush1.bf16.msra.mxu0 0
    %1486 = vmatprep.subr.bf16.mxu0 0
    %1487 = vmatpush1.bf16.msra.mxu0 0
    %1488 = vmatprep.subr.bf16.mxu0 0
    %1489 = vmatpush1.bf16.msra.mxu0 0
    %1490 = vmatprep.subr.bf16.mxu0 0
    %1491 = vmatpush1.bf16.msra.mxu0 0
    %1492 = vmatprep.subr.bf16.mxu0 0
    %1493 = vmatpush1.bf16.msra.mxu0 0
    %1494 = vmatprep.subr.bf16.mxu0 0
    %1495 = vmatpush1.bf16.msra.mxu0 0
    %1496 = vmatprep.subr.bf16.mxu0 0
    %1497 = vmatpush1.bf16.msra.mxu0 0
    %1498 = vmatprep.subr.bf16.mxu0 0
    %1499 = vmatpush1.bf16.msra.mxu0 0
    %1500 = vmatprep.subr.bf16.mxu0 0
    %1501 = vmatpush1.bf16.msra.mxu0 0
    %1502 = vmatprep.subr.bf16.mxu0 0
    %1503 = vmatpush1.bf16.msra.mxu0 0
    %1504 = vmatprep.subr.bf16.mxu0 0
    %1505 = vmatpush1.bf16.msra.mxu0 0
    %1506 = vmatprep.subr.bf16.mxu0 0
    %1507 = vmatpush1.bf16.msra.mxu0 0
    %1508 = vmatprep.subr.bf16.mxu0 0
    %1509 = vmatpush1.bf16.msra.mxu0 0
    %1510 = vmatprep.mubr.bf16.mxu0 0
    %1511 = vmatmul.mubr.bf16.gmra.mrb[0].mxu0 %v1476
    %v1512 = vpop.f32.mrb[0].mxu0
    %v1513 = vadd.f32 %v1461, %v1512
    %v1514 = vpop.f32.mrb[0].mxu0
    %v1515 = vpop.f32.mrb[0].mxu0
    %v1516 = vadd.f32 %v1461, %v1515
    %v1517 = vpop.f32.mrb[0].mxu0
    %1518 = vdwg.mxu0
    %1519 = vst [vmem:[#allocation14] sm:$0xff] %v1513
    %1520 = vst [vmem:[#allocation14 + $0x8] sm:$0xff] %v1516
    // Predicated region
    $region78: #{tpu_custom_call.1} parent=1 // pred_check
      _
    $region79: #{tpu_custom_call.1} parent=1 // pred_check_branch
      %1522 = sbr.rel (0) target = $region81
    $region80: #{tpu_custom_call.1} parent=1 // pred_region
      %s1524 = ssub.s32 256, 256
      %1525 = vsyncadd [#allocation4], %s1524
      %s1526 = sshll.u32 [#allocation14], 4
      %s1527 = int_to_ptr.vmem [resolvable:$true] %s1526
      %1532 = dma.vmem_to_hbm [thread:$0]  %s1527, 256, %s12, [#allocation4], 128, 128, 8
    $region81: #{tpu_custom_call.1} parent=1 // pred_fallthru
      _
    // Predicated region
    $region82: #{tpu_custom_call.1} parent=1 // pred_check
      _
    $region83: #{tpu_custom_call.1} parent=1 // pred_check_branch
      %1534 = sbr.rel (0) target = $region85
    $region84: #{tpu_custom_call.1} parent=1 // pred_region
      %1535 = dma.done [#allocation4], 256
    $region85: #{tpu_custom_call.1} parent=1 // pred_fallthru
      _
    %1536 = vsyncpa [#allocation3], 1
    %1537 = vsyncpa [#allocation6], 1
    %1538 = vsyncpa [#allocation9], 1
    %1539 = vsyncpa [#allocation12], 1
    %1540 = vsyncpa [#allocation4], 1

</llo_original>
